<compile_context>
chip_gen: v5e
topology: v5e:2x2
jax: 0.10.0
libtpu: 0.0.40
codegen_flags: <defaults>
</compile_context>

<pallas_src>
import functools

import jax
import jax.numpy as jnp
from jax.experimental import pallas as pl
from jax.experimental.pallas import tpu as pltpu


def _leaky_relu(x, slope=0.2):
    return jnp.where(x > 0, x, slope * x)


def _num_tensorcores():
    """2 on v7x (2 TCs/chip), 1 on v5e/v6e; conservative fallback is 1."""
    try:
        kind = jax.devices()[0].device_kind.lower()
    except Exception:  # pragma: no cover
        return 1
    return 2 if ("v7" in kind or "7x" in kind) else 1


def _choose_tile_k(k_per_split, max_tile):
    """Largest multiple of 128 that divides k_per_split and is <= max_tile."""
    t = min(max_tile, k_per_split)
    t = (t // 128) * 128
    while t > 128 and k_per_split % t != 0:
        t -= 128
    assert t >= 128 and k_per_split % t == 0
    return t


# --------------------------------------------------------------------------
# Fused kernel (S == 1, v5e/v6e default): streaming first-layer GEMM with a
# resident f32 accumulator + epilogue (bias, LeakyReLU, layers 2/3) on the
# last K step.  W2/W3/biases are tiny resident VMEM blocks.
# --------------------------------------------------------------------------
def _fused_kernel(x_ref, w1_ref, b1_ref, w2_ref, b2_ref, w3_ref, b3_ref,
                  out_ref, acc_ref):
    k = pl.program_id(0)

    @pl.when(k == 0)
    def _():
        acc_ref[...] = jnp.zeros_like(acc_ref)

    x = x_ref[...]
    w1 = w1_ref[...]                      # streamed tile, consumed at its
    if x.dtype != w1.dtype:               # storage dtype by the MXU
        x = x.astype(w1.dtype)
    acc_ref[...] += jnp.dot(x, w1, preferred_element_type=jnp.float32)

    @pl.when(k == pl.num_programs(0) - 1)
    def _():
        h1 = _leaky_relu(acc_ref[...] + b1_ref[...])          # (B, H1) f32
        w2 = w2_ref[...]
        h1c = h1.astype(w2.dtype) if w2.dtype != jnp.float32 else h1
        h2 = jnp.dot(h1c, w2, preferred_element_type=jnp.float32) + b2_ref[...]
        h2 = _leaky_relu(h2)                                   # (B, H2) f32
        w3 = w3_ref[...].astype(jnp.float32)                   # (1, H2)
        out = jnp.sum(h2 * w3, axis=-1, keepdims=True) + b3_ref[...]
        out_ref[...] = out.astype(out_ref.dtype)               # (B, 1)


# --------------------------------------------------------------------------
# Split path (S >= 2, v7x): kernel 1 streams W1 with a (parallel, arbitrary)
# grid and writes per-split partial sums; kernel 2 is the tiny epilogue.
# --------------------------------------------------------------------------
def _gemm1_kernel(x_ref, w1_ref, out_ref):
    @pl.when(pl.program_id(1) == 0)
    def _():
        out_ref[...] = jnp.zeros_like(out_ref)

    x = x_ref[...]
    w1 = w1_ref[...]
    if x.dtype != w1.dtype:
        x = x.astype(w1.dtype)
    out_ref[...] += jnp.dot(x, w1, preferred_element_type=jnp.float32)


def _epilogue_kernel(h1p_ref, b1_ref, w2_ref, b2_ref, w3_ref, b3_ref, out_ref):
    h1 = jnp.sum(h1p_ref[...], axis=0) + b1_ref[...]           # (B, H1) f32
    h1 = _leaky_relu(h1)
    w2 = w2_ref[...]
    h1c = h1.astype(w2.dtype) if w2.dtype != jnp.float32 else h1
    h2 = jnp.dot(h1c, w2, preferred_element_type=jnp.float32) + b2_ref[...]
    h2 = _leaky_relu(h2)                                        # (B, H2) f32
    w3 = w3_ref[...].astype(jnp.float32)                        # (1, H2)
    out = jnp.sum(h2 * w3, axis=-1, keepdims=True) + b3_ref[...]
    out_ref[...] = out.astype(out_ref.dtype)                    # (B, 1)


@functools.partial(jax.jit, static_argnames=("max_tile_k", "num_k_splits"))
def discriminator_forward(img, params, max_tile_k=None, num_k_splits=None):
    """img: (B, IN_FEATURES) f32 -> validity: (B, 1) f32."""
    w1, b1, w2, b2, w3, b3 = params
    B, K = img.shape
    H1 = w1.shape[1]
    H2 = w2.shape[1]

    if num_k_splits is None:
        num_k_splits = _num_tensorcores()
    S = max(1, int(num_k_splits))

    if max_tile_k is None:
        # bf16 tiles are half the bytes -> stream twice the K per step.
        # (Avoid 8192 f32 on v7x: 32 MiB double-buffered is too tight.)
        max_tile_k = 8192 if w1.dtype.itemsize <= 2 else 4096

    # Zero-pad the reduction dim so each split is a multiple of 128
    # (zero padding does not change the matmul result).
    align = S * 128
    K_pad = ((K + align - 1) // align) * align
    if K_pad != K:
        img = jnp.pad(img, ((0, 0), (0, K_pad - K)))
        w1 = jnp.pad(w1, ((0, K_pad - K), (0, 0)))

    k_per_split = K_pad // S
    tile_k = _choose_tile_k(k_per_split, max_tile_k)
    kt = k_per_split // tile_k                       # K tiles per split

    vmem_limit = 48 * 1024 * 1024

    if S == 1:
        # ---- fused single kernel (one pallas_call, no partials traffic) ---
        cost = pl.CostEstimate(
            flops=2 * B * K_pad * H1 + 2 * B * H1 * H2 + 2 * B * H2,
            transcendentals=0,
            bytes_accessed=(K_pad * H1 * w1.dtype.itemsize     # stream W1
                            + B * K_pad * img.dtype.itemsize   # stream x
                            + H1 * H2 * w2.dtype.itemsize      # W2
                            + B * 4),                          # output
        )
        return pl.pallas_call(
            _fused_kernel,
            out_shape=jax.ShapeDtypeStruct((B, 1), jnp.float32),
            grid=(kt,),
            in_specs=[
                pl.BlockSpec((B, tile_k), lambda k: (0, k)),     # x tile
                # W1 tile; if a profile shows DMA gaps, add
                # pipeline_mode=pl.Buffered(3) here.
                pl.BlockSpec((tile_k, H1), lambda k: (k, 0)),
                pl.BlockSpec((1, H1), lambda k: (0, 0)),         # b1
                pl.BlockSpec((H1, H2), lambda k: (0, 0)),        # W2
                pl.BlockSpec((1, H2), lambda k: (0, 0)),         # b2
                pl.BlockSpec((1, H2), lambda k: (0, 0)),         # W3 (1, H2)
                pl.BlockSpec((1, 1), lambda k: (0, 0)),          # b3
            ],
            out_specs=pl.BlockSpec((B, 1), lambda k: (0, 0)),
            scratch_shapes=[pltpu.VMEM((B, H1), jnp.float32)],
            compiler_params=pltpu.CompilerParams(
                dimension_semantics=("arbitrary",),
                vmem_limit_bytes=vmem_limit,
            ),
            cost_estimate=cost,
        )(img, w1, b1, w2, b2, w3, b3)

    # ---- split-K path (v7x, S == number of TensorCores) -------------------
    cost1 = pl.CostEstimate(
        flops=2 * B * K_pad * H1,
        transcendentals=0,
        bytes_accessed=(K_pad * H1 * w1.dtype.itemsize
                        + B * K_pad * img.dtype.itemsize
                        + S * B * H1 * 4),
    )
    h1_partial = pl.pallas_call(
        _gemm1_kernel,
        out_shape=jax.ShapeDtypeStruct((S, B, H1), jnp.float32),
        grid=(S, kt),
        in_specs=[
            pl.BlockSpec((B, tile_k), lambda s, k: (0, s * kt + k)),   # x
            pl.BlockSpec((tile_k, H1), lambda s, k: (s * kt + k, 0)),  # W1
        ],
        out_specs=pl.BlockSpec((None, B, H1), lambda s, k: (s, 0, 0)),
        compiler_params=pltpu.CompilerParams(
            dimension_semantics=("parallel", "arbitrary"),
            vmem_limit_bytes=vmem_limit,
        ),
        cost_estimate=cost1,
    )(img, w1)

    return pl.pallas_call(
        _epilogue_kernel,
        out_shape=jax.ShapeDtypeStruct((B, 1), jnp.float32),
        grid=(1,),
        in_specs=[
            pl.BlockSpec((S, B, H1), lambda i: (0, 0, 0)),   # partial sums
            pl.BlockSpec((1, H1), lambda i: (0, 0)),         # b1
            pl.BlockSpec((H1, H2), lambda i: (0, 0)),        # W2
            pl.BlockSpec((1, H2), lambda i: (0, 0)),         # b2
            pl.BlockSpec((1, H2), lambda i: (0, 0)),         # W3 (1, H2)
            pl.BlockSpec((1, 1), lambda i: (0, 0)),          # b3
        ],
        out_specs=pl.BlockSpec((B, 1), lambda i: (0, 0)),
        compiler_params=pltpu.CompilerParams(
            dimension_semantics=("arbitrary",)),
    )(h1_partial, b1, w2, b2, w3, b3)


def init_discriminator_params(key, in_features, h1=512, h2=256):
    """Deterministic init mimicking torch.nn.Linear default:
    U(-1/sqrt(fan_in), 1/sqrt(fan_in)).  Weights stored (in, out); the last
    layer's weight is stored as (1, h2) for a lane-dense epilogue."""
    def linear(k, fan_in, fan_out):
        kw, kb = jax.random.split(k)
        bound = 1.0 / jnp.sqrt(fan_in)
        w = jax.random.uniform(kw, (fan_in, fan_out), jnp.float32, -bound, bound)
        b = jax.random.uniform(kb, (1, fan_out), jnp.float32, -bound, bound)
        return w, b

    k1, k2, k3 = jax.random.split(key, 3)
    w1, b1 = linear(k1, in_features, h1)
    w2, b2 = linear(k2, h1, h2)
    w3, b3 = linear(k3, h2, 1)
    return (w1, b1, w2, b2, w3.T, b3)   # w3 stored as (1, h2)


def to_bf16_weights(params):
    """Default storage precision for the bandwidth-bound path."""
    w1, b1, w2, b2, w3, b3 = params
    return (w1.astype(jnp.bfloat16), b1, w2.astype(jnp.bfloat16), b2,
            w3.astype(jnp.bfloat16), b3)


def reference_forward(img, params):
    """Pure-JAX reference.  For f32 params this is exactly the PyTorch
    forward; for bf16 params it uses the same matched-precision inputs the
    kernel feeds the MXU (bf16 storage, f32 accumulation)."""
    w1, b1, w2, b2, w3, b3 = params
    x = img.astype(w1.dtype)
    h1 = _leaky_relu(jnp.dot(x, w1, preferred_element_type=jnp.float32) + b1)
    h2 = _leaky_relu(
        jnp.dot(h1.astype(w2.dtype), w2, preferred_element_type=jnp.float32)
        + b2)
    return (jnp.dot(h2, w3.astype(jnp.float32).T,
                    preferred_element_type=jnp.float32) + b3)


if __name__ == "__main__":
    # Real module uses IN_FEATURES = 512 * 512; demo uses a small 32x32 image
    # flattened, which exercises the same kernel paths.
    BATCH = 4
    IN_FEATURES = 32 * 32   # scaled-down stand-in for 512 * 512

    key = jax.random.PRNGKey(0)
    k_params, k_img = jax.random.split(key)

    params_f32 = init_discriminator_params(k_params, IN_FEATURES)
    params_bf16 = to_bf16_weights(params_f32)      # default storage precision
    img = jax.random.normal(k_img, (BATCH, IN_FEATURES), jnp.float32)

    # --- default bf16-streaming path (auto split count for this device) ----
    validity = jax.block_until_ready(discriminator_forward(img, params_bf16))
    expected_bf16 = reference_forward(img, params_bf16)
    assert validity.shape == (BATCH, 1)
    assert jnp.allclose(validity, expected_bf16, atol=2e-3, rtol=2e-3), (
        validity, expected_bf16)

    # --- exercise both structural paths explicitly (fused S=1, split S=2) --
    v_bf16_s1 = jax.block_until_ready(
        discriminator_forward(img, params_bf16, num_k_splits=1))
    v_bf16_s2 = jax.block_until_ready(
        discriminator_forward(img, params_bf16, num_k_splits=2))
    assert jnp.allclose(v_bf16_s1, expected_bf16, atol=2e-3, rtol=2e-3)
    assert jnp.allclose(v_bf16_s2, expected_bf16, atol=2e-3, rtol=2e-3)

    # --- f32 path (bit-comparable to the PyTorch f32 reference) ------------
    expected_f32 = reference_forward(img, params_f32)
    v_f32_s1 = jax.block_until_ready(
        discriminator_forward(img, params_f32, num_k_splits=1))
    v_f32_s2 = jax.block_until_ready(
        discriminator_forward(img, params_f32, num_k_splits=2))
    assert jnp.allclose(v_f32_s1, expected_f32, atol=1e-4, rtol=1e-4)
    assert jnp.allclose(v_f32_s2, expected_f32, atol=1e-4, rtol=1e-4)

    # --- non-128-aligned feature count exercises the zero-padding path -----
    K_ODD = 1000
    params_odd = init_discriminator_params(jax.random.PRNGKey(1), K_ODD)
    img_odd = jax.random.normal(jax.random.PRNGKey(2), (BATCH, K_ODD),
                                jnp.float32)
    v_odd = jax.block_until_ready(
        discriminator_forward(img_odd, params_odd, num_k_splits=1))
    assert jnp.allclose(v_odd, reference_forward(img_odd, params_odd),
                        atol=1e-4, rtol=1e-4)

    print("KERNEL_OK")
</pallas_src>

<mosaic_0001>
module attributes {stable_mosaic.version = 11 : i64} {
  func.func @_fused_kernel(%arg0: i32, %arg1: memref<4x1024xf32, #tpu.memory_space<vmem>>, %arg2: memref<1024x512xbf16, #tpu.memory_space<vmem>>, %arg3: memref<1x512xf32, #tpu.memory_space<vmem>>, %arg4: memref<512x256xbf16, #tpu.memory_space<vmem>>, %arg5: memref<1x256xf32, #tpu.memory_space<vmem>>, %arg6: memref<1x256xbf16, #tpu.memory_space<vmem>>, %arg7: memref<1x1xf32, #tpu.memory_space<vmem>>, %arg8: memref<4x1xf32, #tpu.memory_space<vmem>>, %arg9: memref<4x512xf32, #tpu.memory_space<vmem>>) attributes {dimension_semantics = [#tpu.dimension_semantics<arbitrary>], iteration_bounds = array<i64: 1>, scalar_prefetch = 0 : i64, scratch_operands = 1 : i64, tpu.core_type = #tpu.core_type<tc>, window_params = [{transform_indices = @transform_0, window_bounds = array<i64: 4, 1024>}, {transform_indices = @transform_1, window_bounds = array<i64: 1024, 512>}, {pipeline_mode = #tpu.pipeline_mode<synchronous>, transform_indices = @transform_2, window_bounds = array<i64: 1, 512>}, {pipeline_mode = #tpu.pipeline_mode<synchronous>, transform_indices = @transform_3, window_bounds = array<i64: 512, 256>}, {pipeline_mode = #tpu.pipeline_mode<synchronous>, transform_indices = @transform_4, window_bounds = array<i64: 1, 256>}, {pipeline_mode = #tpu.pipeline_mode<synchronous>, transform_indices = @transform_5, window_bounds = array<i64: 1, 256>}, {pipeline_mode = #tpu.pipeline_mode<synchronous>, transform_indices = @transform_6, window_bounds = array<i64: 1, 1>}, {pipeline_mode = #tpu.pipeline_mode<synchronous>, transform_indices = @transform_7, window_bounds = array<i64: 4, 1>}]} {
    %c0_i32 = arith.constant 0 : i32
    %0 = arith.cmpi eq, %arg0, %c0_i32 : i32
    %1 = arith.extui %0 : i1 to i32
    %c0_i32_0 = arith.constant 0 : i32
    %2 = arith.cmpi ne, %1, %c0_i32_0 : i32
    scf.if %2 {
      %cst_10 = arith.constant 0.000000e+00 : f32
      %13 = vector.broadcast %cst_10 : f32 to vector<4x512xf32>
      %c0_11 = arith.constant 0 : index
      %c0_12 = arith.constant 0 : index
      %14 = vector.load %arg9[%c0_11, %c0_12] : memref<4x512xf32, #tpu.memory_space<vmem>>, vector<4x512xf32>
      tpu.vector_store %arg9[%c0_11, %c0_12], %13 {strides = array<i32>} : memref<4x512xf32, #tpu.memory_space<vmem>>, vector<4x512xf32>,
    } else {
    }
    %c0 = arith.constant 0 : index
    %c0_1 = arith.constant 0 : index
    %3 = vector.load %arg1[%c0, %c0_1] : memref<4x1024xf32, #tpu.memory_space<vmem>>, vector<4x1024xf32>
    %c0_2 = arith.constant 0 : index
    %c0_3 = arith.constant 0 : index
    %4 = vector.load %arg2[%c0_2, %c0_3] : memref<1024x512xbf16, #tpu.memory_space<vmem>>, vector<1024x512xbf16>
    %5 = arith.truncf %3 : vector<4x1024xf32> to vector<4x1024xbf16>
    %c0_4 = arith.constant 0 : index
    %c0_5 = arith.constant 0 : index
    %6 = vector.load %arg9[%c0_4, %c0_5] : memref<4x512xf32, #tpu.memory_space<vmem>>, vector<4x512xf32>
    %cst = arith.constant dense<0.000000e+00> : vector<4x512xf32>
    %7 = tpu.matmul %5, %4, %cst {dimension_numbers = #tpu.dot_dimension_numbers<[1], [0], [0], [1], [0, 0, 1, 1], [], []>} : vector<4x1024xbf16>, vector<1024x512xbf16>, vector<4x512xf32> -> vector<4x512xf32>
    %8 = arith.addf %6, %7 : vector<4x512xf32>
    %c0_6 = arith.constant 0 : index
    %c0_7 = arith.constant 0 : index
    %9 = vector.load %arg9[%c0_6, %c0_7] : memref<4x512xf32, #tpu.memory_space<vmem>>, vector<4x512xf32>
    tpu.vector_store %arg9[%c0_6, %c0_7], %8 {strides = array<i32>} : memref<4x512xf32, #tpu.memory_space<vmem>>, vector<4x512xf32>,
    %c0_i32_8 = arith.constant 0 : i32
    %10 = arith.cmpi eq, %arg0, %c0_i32_8 : i32
    %11 = arith.extui %10 : i1 to i32
    %c0_i32_9 = arith.constant 0 : i32
    %12 = arith.cmpi ne, %11, %c0_i32_9 : i32
    scf.if %12 {
      %c0_10 = arith.constant 0 : index
      %c0_11 = arith.constant 0 : index
      %13 = vector.load %arg9[%c0_10, %c0_11] : memref<4x512xf32, #tpu.memory_space<vmem>>, vector<4x512xf32>
      %c0_12 = arith.constant 0 : index
      %c0_13 = arith.constant 0 : index
      %14 = vector.load %arg3[%c0_12, %c0_13] : memref<1x512xf32, #tpu.memory_space<vmem>>, vector<1x512xf32>
      %15 = vector.broadcast %14 : vector<1x512xf32> to vector<4x512xf32>
      %16 = arith.addf %13, %15 : vector<4x512xf32>
      %cst_14 = arith.constant 0.000000e+00 : f32
      %17 = vector.broadcast %cst_14 : f32 to vector<4x512xf32>
      %18 = arith.cmpf ogt, %16, %17 : vector<4x512xf32>
      %cst_15 = arith.constant 2.000000e-01 : f32
      %19 = vector.broadcast %cst_15 : f32 to vector<4x512xf32>
      %20 = arith.mulf %19, %16 : vector<4x512xf32>
      %21 = arith.select %18, %16, %20 : vector<4x512xi1>, vector<4x512xf32>
      %c0_16 = arith.constant 0 : index
      %c0_17 = arith.constant 0 : index
      %22 = vector.load %arg4[%c0_16, %c0_17] : memref<512x256xbf16, #tpu.memory_space<vmem>>, vector<512x256xbf16>
      %23 = arith.truncf %21 : vector<4x512xf32> to vector<4x512xbf16>
      %cst_18 = arith.constant dense<0.000000e+00> : vector<4x256xf32>
      %24 = tpu.matmul %23, %22, %cst_18 {dimension_numbers = #tpu.dot_dimension_numbers<[1], [0], [0], [1], [0, 0, 1, 1], [], []>} : vector<4x512xbf16>, vector<512x256xbf16>, vector<4x256xf32> -> vector<4x256xf32>
      %c0_19 = arith.constant 0 : index
      %c0_20 = arith.constant 0 : index
      %25 = vector.load %arg5[%c0_19, %c0_20] : memref<1x256xf32, #tpu.memory_space<vmem>>, vector<1x256xf32>
      %26 = vector.broadcast %25 : vector<1x256xf32> to vector<4x256xf32>
      %27 = arith.addf %24, %26 : vector<4x256xf32>
      %cst_21 = arith.constant 0.000000e+00 : f32
      %28 = vector.broadcast %cst_21 : f32 to vector<4x256xf32>
      %29 = arith.cmpf ogt, %27, %28 : vector<4x256xf32>
      %cst_22 = arith.constant 2.000000e-01 : f32
      %30 = vector.broadcast %cst_22 : f32 to vector<4x256xf32>
      %31 = arith.mulf %30, %27 : vector<4x256xf32>
      %32 = arith.select %29, %27, %31 : vector<4x256xi1>, vector<4x256xf32>
      %c0_23 = arith.constant 0 : index
      %c0_24 = arith.constant 0 : index
      %33 = vector.load %arg6[%c0_23, %c0_24] : memref<1x256xbf16, #tpu.memory_space<vmem>>, vector<1x256xbf16>
      %34 = arith.extf %33 : vector<1x256xbf16> to vector<1x256xf32>
      %35 = vector.broadcast %34 : vector<1x256xf32> to vector<4x256xf32>
      %36 = arith.mulf %32, %35 : vector<4x256xf32>
      %cst_25 = arith.constant dense<0.000000e+00> : vector<4xf32>
      %37 = vector.multi_reduction <add>, %36, %cst_25 [1] : vector<4x256xf32> to vector<4xf32>
      %38 = vector.shape_cast %37 : vector<4xf32> to vector<4x1xf32>
      %c0_26 = arith.constant 0 : index
      %c0_27 = arith.constant 0 : index
      %39 = vector.load %arg7[%c0_26, %c0_27] : memref<1x1xf32, #tpu.memory_space<vmem>>, vector<1x1xf32>
      %40 = vector.broadcast %39 : vector<1x1xf32> to vector<4x1xf32>
      %41 = arith.addf %38, %40 : vector<4x1xf32>
      %c0_28 = arith.constant 0 : index
      %c0_29 = arith.constant 0 : index
      %42 = vector.load %arg8[%c0_28, %c0_29] : memref<4x1xf32, #tpu.memory_space<vmem>>, vector<4x1xf32>
      tpu.vector_store %arg8[%c0_28, %c0_29], %41 {strides = array<i32>} : memref<4x1xf32, #tpu.memory_space<vmem>>, vector<4x1xf32>,
    } else {
    }
    return
  }
  func.func @transform_0(%arg0: i32) -> (i32, i32) {
    %c0_i32 = arith.constant 0 : i32
    %c0_i32_0 = arith.constant 0 : i32
    return %c0_i32, %arg0 : i32, i32
  }
  func.func @transform_1(%arg0: i32) -> (i32, i32) {
    %c0_i32 = arith.constant 0 : i32
    %c0_i32_0 = arith.constant 0 : i32
    return %arg0, %c0_i32 : i32, i32
  }
  func.func @transform_2(%arg0: i32) -> (i32, i32) {
    %c0_i32 = arith.constant 0 : i32
    %c0_i32_0 = arith.constant 0 : i32
    %c0_i32_1 = arith.constant 0 : i32
    return %c0_i32, %c0_i32_0 : i32, i32
  }
  func.func @transform_3(%arg0: i32) -> (i32, i32) {
    %c0_i32 = arith.constant 0 : i32
    %c0_i32_0 = arith.constant 0 : i32
    %c0_i32_1 = arith.constant 0 : i32
    return %c0_i32, %c0_i32_0 : i32, i32
  }
  func.func @transform_4(%arg0: i32) -> (i32, i32) {
    %c0_i32 = arith.constant 0 : i32
    %c0_i32_0 = arith.constant 0 : i32
    %c0_i32_1 = arith.constant 0 : i32
    return %c0_i32, %c0_i32_0 : i32, i32
  }
  func.func @transform_5(%arg0: i32) -> (i32, i32) {
    %c0_i32 = arith.constant 0 : i32
    %c0_i32_0 = arith.constant 0 : i32
    %c0_i32_1 = arith.constant 0 : i32
    return %c0_i32, %c0_i32_0 : i32, i32
  }
  func.func @transform_6(%arg0: i32) -> (i32, i32) {
    %c0_i32 = arith.constant 0 : i32
    %c0_i32_0 = arith.constant 0 : i32
    %c0_i32_1 = arith.constant 0 : i32
    return %c0_i32, %c0_i32_0 : i32, i32
  }
  func.func @transform_7(%arg0: i32) -> (i32, i32) {
    %c0_i32 = arith.constant 0 : i32
    %c0_i32_0 = arith.constant 0 : i32
    %c0_i32_1 = arith.constant 0 : i32
    return %c0_i32, %c0_i32_0 : i32, i32
  }
}

</mosaic_0001>

<llo_original>
// kernel: discriminator_forward.1
$region0: #{discriminator_forward.1}
  #allocation0 [shape = 'u32[]', space=smem, size = 0x4, offset = 0x4, fixed_abs, tag = 'smem constant byte address 0x4 - core index']
  #allocation1 [shape = 'u32[72,128]{1,0:T(1,128)}', space=vmem, size = 0x9000, scoped, tag = 'internal scratch']
  #allocation2 [shape = 'f32[4,512]{1,0:T(4,128)}', space=vmem, size = 0x2000, scoped, tag = 'scratch operand']
  #allocation3 [shape = 'f32[1,1]{1,0:T(1,128)S(1)}', space=vmem, size = 0x200, scoped, tag = 'scoped memory for discriminator_forward.1']
  %s0 = inlined_call_operand.hbm [shape: f32[4,1024], index: 0, kind: input, shape index: {}]
  %s1 = inlined_call_operand.hbm [shape: bf16[1024,512], index: 1, kind: input, shape index: {}]
  %s2 = inlined_call_operand.hbm [shape: f32[1,512], index: 2, kind: input, shape index: {}]
  %s3 = inlined_call_operand.hbm [shape: bf16[512,256], index: 3, kind: input, shape index: {}]
  %s4 = inlined_call_operand.vmem [shape: f32[1,256], index: 4, kind: input, shape index: {}]
  %s5 = inlined_call_operand.vmem [shape: bf16[1,256], index: 5, kind: input, shape index: {}]
  %s6 = inlined_call_operand.<no memory space> [shape: f32[1,1], index: 6, kind: input, shape index: {}]
  %s7 = inlined_call_operand.vmem [shape: f32[4,1], index: 7, kind: output, shape index: {}]
  %s8 = sld [smem:[#allocation0]]
  $region62: #{discriminator_forward.1} parent=0
    _
  %s10 = ssub.s32 1, %s8
  %s11 = scalar_select 0, %s10, %s8
  %v12 = vstv %s6
  %13 = vst [vmem:[#allocation3] sm:$0x1] %v12
  $region1: #{discriminator_forward.1} parent=0
    #allocation4 [shape = 'u8[16384]{0}', space=vmem, size = 0x4000, scoped, tag = 'input window, operand 0, single buffered']
    #allocation5 [shape = 's32[1]{0}', space=sflag, size = 0x4, scoped, tag = 'scoped memory for discriminator_forward.1']
    #allocation6 [shape = 'u8[1048576]{0}', space=vmem, size = 0x100000, scoped, tag = 'input window, operand 1, single buffered']
    #allocation7 [shape = 's32[1]{0}', space=sflag, size = 0x4, scoped, tag = 'scoped memory for discriminator_forward.1']
    #allocation8 [shape = 'u8[2048]{0}', space=vmem, size = 0x800, scoped, tag = 'input window, operand 2, single buffered']
    #allocation9 [shape = 'u8[262144]{0}', space=vmem, size = 0x40000, scoped, tag = 'input window, operand 3, single buffered']
    #allocation10 [shape = 's32[1]{0}', space=sflag, size = 0x4, scoped, tag = 'scoped memory for discriminator_forward.1']
    %14 = vsyncpa [#allocation5], 0
    %15 = vsyncpa [#allocation7], 0
    %16 = vsyncpa [#allocation10], 0
    // Predicated region
    $region2: #{discriminator_forward.1} parent=1 // pred_check
      _
    $region3: #{discriminator_forward.1} parent=1 // pred_check_branch
      %18 = sbr.rel (0) target = $region5
    $region4: #{discriminator_forward.1} parent=1 // pred_region
      %20 = vsyncadd [#allocation5], 0
      %s22 = sshll.u32 %s0, 4
      %s23 = int_to_ptr.hbm [resolvable:$true] %s22
      %s24 = sshll.u32 [#allocation4], 4
      %s25 = int_to_ptr.vmem [resolvable:$true] %s24
      %27 = dma.hbm_to_vmem [thread:$0]  %s23, 512, %s25, [#allocation5]
    $region5: #{discriminator_forward.1} parent=1 // pred_fallthru
      _
    // Predicated region
    $region6: #{discriminator_forward.1} parent=1 // pred_check
      _
    $region7: #{discriminator_forward.1} parent=1 // pred_check_branch
      %29 = sbr.rel (0) target = $region9
    $region8: #{discriminator_forward.1} parent=1 // pred_region
      %31 = vsyncadd [#allocation7], 0
      %s32 = sshll.u32 %s1, 4
      %s33 = int_to_ptr.hbm [resolvable:$true] %s32
      %s34 = sshll.u32 [#allocation6], 4
      %s35 = int_to_ptr.vmem [resolvable:$true] %s34
      %40 = dma.hbm_to_vmem [thread:$0]  %s33, 32768, %s35, [#allocation7], 256, 256, 16
    $region9: #{discriminator_forward.1} parent=1 // pred_fallthru
      _
    // Predicated region
    $region10: #{discriminator_forward.1} parent=1 // pred_check
      _
    $region11: #{discriminator_forward.1} parent=1 // pred_check_branch
      %42 = sbr.rel (0) target = $region13
    $region12: #{discriminator_forward.1} parent=1 // pred_region
      %44 = vsyncadd [#allocation7], 0
      %s46 = sshll.u32 %s2, 4
      %s47 = int_to_ptr.hbm [resolvable:$true] %s46
      %s48 = sshll.u32 [#allocation8], 4
      %s49 = int_to_ptr.vmem [resolvable:$true] %s48
      %51 = dma.hbm_to_vmem [thread:$0]  %s47, 64, %s49, [#allocation7]
    $region13: #{discriminator_forward.1} parent=1 // pred_fallthru
      _
    // Predicated region
    $region14: #{discriminator_forward.1} parent=1 // pred_check
      _
    $region15: #{discriminator_forward.1} parent=1 // pred_check_branch
      %53 = sbr.rel (0) target = $region17
    $region16: #{discriminator_forward.1} parent=1 // pred_region
      %55 = vsyncadd [#allocation10], 0
      %s56 = sshll.u32 %s3, 4
      %s57 = int_to_ptr.hbm [resolvable:$true] %s56
      %s58 = sshll.u32 [#allocation9], 4
      %s59 = int_to_ptr.vmem [resolvable:$true] %s58
      %64 = dma.hbm_to_vmem [thread:$0]  %s57, 8192, %s59, [#allocation10], 128, 128, 8
    $region17: #{discriminator_forward.1} parent=1 // pred_fallthru
      _
    // Predicated region
    $region18: #{discriminator_forward.1} parent=1 // pred_check
      _
    $region19: #{discriminator_forward.1} parent=1 // pred_check_branch
      %66 = sbr.rel (0) target = $region21
    $region20: #{discriminator_forward.1} parent=1 // pred_region
      _
    $region21: #{discriminator_forward.1} parent=1 // pred_fallthru
      _
    // Predicated region
    $region22: #{discriminator_forward.1} parent=1 // pred_check
      _
    $region23: #{discriminator_forward.1} parent=1 // pred_check_branch
      %68 = sbr.rel (0) target = $region25
    $region24: #{discriminator_forward.1} parent=1 // pred_region
      _
    $region25: #{discriminator_forward.1} parent=1 // pred_fallthru
      _
    // Predicated region
    $region26: #{discriminator_forward.1} parent=1 // pred_check
      _
    $region27: #{discriminator_forward.1} parent=1 // pred_check_branch
      %70 = sbr.rel (0) target = $region29
    $region28: #{discriminator_forward.1} parent=1 // pred_region
      _
    $region29: #{discriminator_forward.1} parent=1 // pred_fallthru
      _
    // Predicated region
    $region30: #{discriminator_forward.1} parent=1 // pred_check
      _
    $region31: #{discriminator_forward.1} parent=1 // pred_check_branch
      %72 = sbr.rel (0) target = $region33
    $region32: #{discriminator_forward.1} parent=1 // pred_region
      %74 = dma.done [#allocation5], 512
    $region33: #{discriminator_forward.1} parent=1 // pred_fallthru
      _
    // Predicated region
    $region34: #{discriminator_forward.1} parent=1 // pred_check
      _
    $region35: #{discriminator_forward.1} parent=1 // pred_check_branch
      %76 = sbr.rel (0) target = $region37
    $region36: #{discriminator_forward.1} parent=1 // pred_region
      %78 = dma.done [#allocation7], 32768
    $region37: #{discriminator_forward.1} parent=1 // pred_fallthru
      _
    // Predicated region
    $region38: #{discriminator_forward.1} parent=1 // pred_check
      _
    $region39: #{discriminator_forward.1} parent=1 // pred_check_branch
      %80 = sbr.rel (0) target = $region41
    $region40: #{discriminator_forward.1} parent=1 // pred_region
      %82 = dma.done [#allocation7], 64
    $region41: #{discriminator_forward.1} parent=1 // pred_fallthru
      _
    // Predicated region
    $region42: #{discriminator_forward.1} parent=1 // pred_check
      _
    $region43: #{discriminator_forward.1} parent=1 // pred_check_branch
      %84 = sbr.rel (0) target = $region45
    $region44: #{discriminator_forward.1} parent=1 // pred_region
      %86 = dma.done [#allocation10], 8192
    $region45: #{discriminator_forward.1} parent=1 // pred_fallthru
      _
    %p87 = scmp.eq.s32.totalorder 0, 0
    // Predicated region
    $region46: #{discriminator_forward.1} parent=1 // pred_check
      %p88 = pneg %p87
    $region47: #{discriminator_forward.1} parent=1 // pred_check_branch
      %90 = sbr.rel (%p88) target = $region49
    $region48: #{discriminator_forward.1} parent=1 // pred_region
      %91 = vst [vmem:[#allocation2] sm:$0xff] 0.0
      %92 = vst [vmem:[#allocation2 + $0x8] sm:$0xff] 0.0
    $region49: #{discriminator_forward.1} parent=1 // pred_fallthru
      _
    %v93 = vld [vmem:[#allocation4] sm:$0xff]
    %v94 = vld [vmem:[#allocation4 + $0x8] sm:$0xff]
    %v95 = vld [vmem:[#allocation4 + $0x10] sm:$0xff]
    %v96 = vld [vmem:[#allocation4 + $0x18] sm:$0xff]
    %v97 = vld [vmem:[#allocation6] sm:$0xff]
    %v98 = vld [vmem:[#allocation6 + $0x8] sm:$0xff]
    %v99 = vld [vmem:[#allocation6 + $0x10] sm:$0xff]
    %v100 = vld [vmem:[#allocation6 + $0x18] sm:$0xff]
    %v101 = vld [vmem:[#allocation6 + $0x20] sm:$0xff]
    %v102 = vld [vmem:[#allocation6 + $0x28] sm:$0xff]
    %v103 = vld [vmem:[#allocation6 + $0x30] sm:$0xff]
    %v104 = vld [vmem:[#allocation6 + $0x38] sm:$0xff]
    %v105 = vld [vmem:[#allocation6 + $0x40] sm:$0xff]
    %v106 = vld [vmem:[#allocation6 + $0x48] sm:$0xff]
    %v107 = vld [vmem:[#allocation6 + $0x50] sm:$0xff]
    %v108 = vld [vmem:[#allocation6 + $0x58] sm:$0xff]
    %v109 = vld [vmem:[#allocation6 + $0x60] sm:$0xff]
    %v110 = vld [vmem:[#allocation6 + $0x68] sm:$0xff]
    %v111 = vld [vmem:[#allocation6 + $0x70] sm:$0xff]
    %v112 = vld [vmem:[#allocation6 + $0x78] sm:$0xff]
    %v113 = vld [vmem:[#allocation6 + $0x80] sm:$0xff]
    %v114 = vld [vmem:[#allocation6 + $0x88] sm:$0xff]
    %v115 = vld [vmem:[#allocation6 + $0x90] sm:$0xff]
    %v116 = vld [vmem:[#allocation6 + $0x98] sm:$0xff]
    %v117 = vld [vmem:[#allocation6 + $0xa0] sm:$0xff]
    %v118 = vld [vmem:[#allocation6 + $0xa8] sm:$0xff]
    %v119 = vld [vmem:[#allocation6 + $0xb0] sm:$0xff]
    %v120 = vld [vmem:[#allocation6 + $0xb8] sm:$0xff]
    %v121 = vld [vmem:[#allocation6 + $0xc0] sm:$0xff]
    %v122 = vld [vmem:[#allocation6 + $0xc8] sm:$0xff]
    %v123 = vld [vmem:[#allocation6 + $0xd0] sm:$0xff]
    %v124 = vld [vmem:[#allocation6 + $0xd8] sm:$0xff]
    %v125 = vld [vmem:[#allocation6 + $0xe0] sm:$0xff]
    %v126 = vld [vmem:[#allocation6 + $0xe8] sm:$0xff]
    %v127 = vld [vmem:[#allocation6 + $0xf0] sm:$0xff]
    %v128 = vld [vmem:[#allocation6 + $0xf8] sm:$0xff]
    %v129 = vld [vmem:[#allocation6 + $0x100] sm:$0xff]
    %v130 = vld [vmem:[#allocation6 + $0x108] sm:$0xff]
    %v131 = vld [vmem:[#allocation6 + $0x110] sm:$0xff]
    %v132 = vld [vmem:[#allocation6 + $0x118] sm:$0xff]
    %v133 = vld [vmem:[#allocation6 + $0x120] sm:$0xff]
    %v134 = vld [vmem:[#allocation6 + $0x128] sm:$0xff]
    %v135 = vld [vmem:[#allocation6 + $0x130] sm:$0xff]
    %v136 = vld [vmem:[#allocation6 + $0x138] sm:$0xff]
    %v137 = vld [vmem:[#allocation6 + $0x140] sm:$0xff]
    %v138 = vld [vmem:[#allocation6 + $0x148] sm:$0xff]
    %v139 = vld [vmem:[#allocation6 + $0x150] sm:$0xff]
    %v140 = vld [vmem:[#allocation6 + $0x158] sm:$0xff]
    %v141 = vld [vmem:[#allocation6 + $0x160] sm:$0xff]
    %v142 = vld [vmem:[#allocation6 + $0x168] sm:$0xff]
    %v143 = vld [vmem:[#allocation6 + $0x170] sm:$0xff]
    %v144 = vld [vmem:[#allocation6 + $0x178] sm:$0xff]
    %v145 = vld [vmem:[#allocation6 + $0x180] sm:$0xff]
    %v146 = vld [vmem:[#allocation6 + $0x188] sm:$0xff]
    %v147 = vld [vmem:[#allocation6 + $0x190] sm:$0xff]
    %v148 = vld [vmem:[#allocation6 + $0x198] sm:$0xff]
    %v149 = vld [vmem:[#allocation6 + $0x1a0] sm:$0xff]
    %v150 = vld [vmem:[#allocation6 + $0x1a8] sm:$0xff]
    %v151 = vld [vmem:[#allocation6 + $0x1b0] sm:$0xff]
    %v152 = vld [vmem:[#allocation6 + $0x1b8] sm:$0xff]
    %v153 = vld [vmem:[#allocation6 + $0x1c0] sm:$0xff]
    %v154 = vld [vmem:[#allocation6 + $0x1c8] sm:$0xff]
    %v155 = vld [vmem:[#allocation6 + $0x1d0] sm:$0xff]
    %v156 = vld [vmem:[#allocation6 + $0x1d8] sm:$0xff]
    %v157 = vld [vmem:[#allocation6 + $0x1e0] sm:$0xff]
    %v158 = vld [vmem:[#allocation6 + $0x1e8] sm:$0xff]
    %v159 = vld [vmem:[#allocation6 + $0x1f0] sm:$0xff]
    %v160 = vld [vmem:[#allocation6 + $0x1f8] sm:$0xff]
    %v161 = vld [vmem:[#allocation6 + $0x200] sm:$0xff]
    %v162 = vld [vmem:[#allocation6 + $0x208] sm:$0xff]
    %v163 = vld [vmem:[#allocation6 + $0x210] sm:$0xff]
    %v164 = vld [vmem:[#allocation6 + $0x218] sm:$0xff]
    %v165 = vld [vmem:[#allocation6 + $0x220] sm:$0xff]
    %v166 = vld [vmem:[#allocation6 + $0x228] sm:$0xff]
    %v167 = vld [vmem:[#allocation6 + $0x230] sm:$0xff]
    %v168 = vld [vmem:[#allocation6 + $0x238] sm:$0xff]
    %v169 = vld [vmem:[#allocation6 + $0x240] sm:$0xff]
    %v170 = vld [vmem:[#allocation6 + $0x248] sm:$0xff]
    %v171 = vld [vmem:[#allocation6 + $0x250] sm:$0xff]
    %v172 = vld [vmem:[#allocation6 + $0x258] sm:$0xff]
    %v173 = vld [vmem:[#allocation6 + $0x260] sm:$0xff]
    %v174 = vld [vmem:[#allocation6 + $0x268] sm:$0xff]
    %v175 = vld [vmem:[#allocation6 + $0x270] sm:$0xff]
    %v176 = vld [vmem:[#allocation6 + $0x278] sm:$0xff]
    %v177 = vld [vmem:[#allocation6 + $0x280] sm:$0xff]
    %v178 = vld [vmem:[#allocation6 + $0x288] sm:$0xff]
    %v179 = vld [vmem:[#allocation6 + $0x290] sm:$0xff]
    %v180 = vld [vmem:[#allocation6 + $0x298] sm:$0xff]
    %v181 = vld [vmem:[#allocation6 + $0x2a0] sm:$0xff]
    %v182 = vld [vmem:[#allocation6 + $0x2a8] sm:$0xff]
    %v183 = vld [vmem:[#allocation6 + $0x2b0] sm:$0xff]
    %v184 = vld [vmem:[#allocation6 + $0x2b8] sm:$0xff]
    %v185 = vld [vmem:[#allocation6 + $0x2c0] sm:$0xff]
    %v186 = vld [vmem:[#allocation6 + $0x2c8] sm:$0xff]
    %v187 = vld [vmem:[#allocation6 + $0x2d0] sm:$0xff]
    %v188 = vld [vmem:[#allocation6 + $0x2d8] sm:$0xff]
    %v189 = vld [vmem:[#allocation6 + $0x2e0] sm:$0xff]
    %v190 = vld [vmem:[#allocation6 + $0x2e8] sm:$0xff]
    %v191 = vld [vmem:[#allocation6 + $0x2f0] sm:$0xff]
    %v192 = vld [vmem:[#allocation6 + $0x2f8] sm:$0xff]
    %v193 = vld [vmem:[#allocation6 + $0x300] sm:$0xff]
    %v194 = vld [vmem:[#allocation6 + $0x308] sm:$0xff]
    %v195 = vld [vmem:[#allocation6 + $0x310] sm:$0xff]
    %v196 = vld [vmem:[#allocation6 + $0x318] sm:$0xff]
    %v197 = vld [vmem:[#allocation6 + $0x320] sm:$0xff]
    %v198 = vld [vmem:[#allocation6 + $0x328] sm:$0xff]
    %v199 = vld [vmem:[#allocation6 + $0x330] sm:$0xff]
    %v200 = vld [vmem:[#allocation6 + $0x338] sm:$0xff]
    %v201 = vld [vmem:[#allocation6 + $0x340] sm:$0xff]
    %v202 = vld [vmem:[#allocation6 + $0x348] sm:$0xff]
    %v203 = vld [vmem:[#allocation6 + $0x350] sm:$0xff]
    %v204 = vld [vmem:[#allocation6 + $0x358] sm:$0xff]
    %v205 = vld [vmem:[#allocation6 + $0x360] sm:$0xff]
    %v206 = vld [vmem:[#allocation6 + $0x368] sm:$0xff]
    %v207 = vld [vmem:[#allocation6 + $0x370] sm:$0xff]
    %v208 = vld [vmem:[#allocation6 + $0x378] sm:$0xff]
    %v209 = vld [vmem:[#allocation6 + $0x380] sm:$0xff]
    %v210 = vld [vmem:[#allocation6 + $0x388] sm:$0xff]
    %v211 = vld [vmem:[#allocation6 + $0x390] sm:$0xff]
    %v212 = vld [vmem:[#allocation6 + $0x398] sm:$0xff]
    %v213 = vld [vmem:[#allocation6 + $0x3a0] sm:$0xff]
    %v214 = vld [vmem:[#allocation6 + $0x3a8] sm:$0xff]
    %v215 = vld [vmem:[#allocation6 + $0x3b0] sm:$0xff]
    %v216 = vld [vmem:[#allocation6 + $0x3b8] sm:$0xff]
    %v217 = vld [vmem:[#allocation6 + $0x3c0] sm:$0xff]
    %v218 = vld [vmem:[#allocation6 + $0x3c8] sm:$0xff]
    %v219 = vld [vmem:[#allocation6 + $0x3d0] sm:$0xff]
    %v220 = vld [vmem:[#allocation6 + $0x3d8] sm:$0xff]
    %v221 = vld [vmem:[#allocation6 + $0x3e0] sm:$0xff]
    %v222 = vld [vmem:[#allocation6 + $0x3e8] sm:$0xff]
    %v223 = vld [vmem:[#allocation6 + $0x3f0] sm:$0xff]
    %v224 = vld [vmem:[#allocation6 + $0x3f8] sm:$0xff]
    %v225 = vld [vmem:[#allocation6 + $0x400] sm:$0xff]
    %v226 = vld [vmem:[#allocation6 + $0x408] sm:$0xff]
    %v227 = vld [vmem:[#allocation6 + $0x410] sm:$0xff]
    %v228 = vld [vmem:[#allocation6 + $0x418] sm:$0xff]
    %v229 = vld [vmem:[#allocation6 + $0x420] sm:$0xff]
    %v230 = vld [vmem:[#allocation6 + $0x428] sm:$0xff]
    %v231 = vld [vmem:[#allocation6 + $0x430] sm:$0xff]
    %v232 = vld [vmem:[#allocation6 + $0x438] sm:$0xff]
    %v233 = vld [vmem:[#allocation6 + $0x440] sm:$0xff]
    %v234 = vld [vmem:[#allocation6 + $0x448] sm:$0xff]
    %v235 = vld [vmem:[#allocation6 + $0x450] sm:$0xff]
    %v236 = vld [vmem:[#allocation6 + $0x458] sm:$0xff]
    %v237 = vld [vmem:[#allocation6 + $0x460] sm:$0xff]
    %v238 = vld [vmem:[#allocation6 + $0x468] sm:$0xff]
    %v239 = vld [vmem:[#allocation6 + $0x470] sm:$0xff]
    %v240 = vld [vmem:[#allocation6 + $0x478] sm:$0xff]
    %v241 = vld [vmem:[#allocation6 + $0x480] sm:$0xff]
    %v242 = vld [vmem:[#allocation6 + $0x488] sm:$0xff]
    %v243 = vld [vmem:[#allocation6 + $0x490] sm:$0xff]
    %v244 = vld [vmem:[#allocation6 + $0x498] sm:$0xff]
    %v245 = vld [vmem:[#allocation6 + $0x4a0] sm:$0xff]
    %v246 = vld [vmem:[#allocation6 + $0x4a8] sm:$0xff]
    %v247 = vld [vmem:[#allocation6 + $0x4b0] sm:$0xff]
    %v248 = vld [vmem:[#allocation6 + $0x4b8] sm:$0xff]
    %v249 = vld [vmem:[#allocation6 + $0x4c0] sm:$0xff]
    %v250 = vld [vmem:[#allocation6 + $0x4c8] sm:$0xff]
    %v251 = vld [vmem:[#allocation6 + $0x4d0] sm:$0xff]
    %v252 = vld [vmem:[#allocation6 + $0x4d8] sm:$0xff]
    %v253 = vld [vmem:[#allocation6 + $0x4e0] sm:$0xff]
    %v254 = vld [vmem:[#allocation6 + $0x4e8] sm:$0xff]
    %v255 = vld [vmem:[#allocation6 + $0x4f0] sm:$0xff]
    %v256 = vld [vmem:[#allocation6 + $0x4f8] sm:$0xff]
    %v257 = vld [vmem:[#allocation6 + $0x500] sm:$0xff]
    %v258 = vld [vmem:[#allocation6 + $0x508] sm:$0xff]
    %v259 = vld [vmem:[#allocation6 + $0x510] sm:$0xff]
    %v260 = vld [vmem:[#allocation6 + $0x518] sm:$0xff]
    %v261 = vld [vmem:[#allocation6 + $0x520] sm:$0xff]
    %v262 = vld [vmem:[#allocation6 + $0x528] sm:$0xff]
    %v263 = vld [vmem:[#allocation6 + $0x530] sm:$0xff]
    %v264 = vld [vmem:[#allocation6 + $0x538] sm:$0xff]
    %v265 = vld [vmem:[#allocation6 + $0x540] sm:$0xff]
    %v266 = vld [vmem:[#allocation6 + $0x548] sm:$0xff]
    %v267 = vld [vmem:[#allocation6 + $0x550] sm:$0xff]
    %v268 = vld [vmem:[#allocation6 + $0x558] sm:$0xff]
    %v269 = vld [vmem:[#allocation6 + $0x560] sm:$0xff]
    %v270 = vld [vmem:[#allocation6 + $0x568] sm:$0xff]
    %v271 = vld [vmem:[#allocation6 + $0x570] sm:$0xff]
    %v272 = vld [vmem:[#allocation6 + $0x578] sm:$0xff]
    %v273 = vld [vmem:[#allocation6 + $0x580] sm:$0xff]
    %v274 = vld [vmem:[#allocation6 + $0x588] sm:$0xff]
    %v275 = vld [vmem:[#allocation6 + $0x590] sm:$0xff]
    %v276 = vld [vmem:[#allocation6 + $0x598] sm:$0xff]
    %v277 = vld [vmem:[#allocation6 + $0x5a0] sm:$0xff]
    %v278 = vld [vmem:[#allocation6 + $0x5a8] sm:$0xff]
    %v279 = vld [vmem:[#allocation6 + $0x5b0] sm:$0xff]
    %v280 = vld [vmem:[#allocation6 + $0x5b8] sm:$0xff]
    %v281 = vld [vmem:[#allocation6 + $0x5c0] sm:$0xff]
    %v282 = vld [vmem:[#allocation6 + $0x5c8] sm:$0xff]
    %v283 = vld [vmem:[#allocation6 + $0x5d0] sm:$0xff]
    %v284 = vld [vmem:[#allocation6 + $0x5d8] sm:$0xff]
    %v285 = vld [vmem:[#allocation6 + $0x5e0] sm:$0xff]
    %v286 = vld [vmem:[#allocation6 + $0x5e8] sm:$0xff]
    %v287 = vld [vmem:[#allocation6 + $0x5f0] sm:$0xff]
    %v288 = vld [vmem:[#allocation6 + $0x5f8] sm:$0xff]
    %v289 = vld [vmem:[#allocation6 + $0x600] sm:$0xff]
    %v290 = vld [vmem:[#allocation6 + $0x608] sm:$0xff]
    %v291 = vld [vmem:[#allocation6 + $0x610] sm:$0xff]
    %v292 = vld [vmem:[#allocation6 + $0x618] sm:$0xff]
    %v293 = vld [vmem:[#allocation6 + $0x620] sm:$0xff]
    %v294 = vld [vmem:[#allocation6 + $0x628] sm:$0xff]
    %v295 = vld [vmem:[#allocation6 + $0x630] sm:$0xff]
    %v296 = vld [vmem:[#allocation6 + $0x638] sm:$0xff]
    %v297 = vld [vmem:[#allocation6 + $0x640] sm:$0xff]
    %v298 = vld [vmem:[#allocation6 + $0x648] sm:$0xff]
    %v299 = vld [vmem:[#allocation6 + $0x650] sm:$0xff]
    %v300 = vld [vmem:[#allocation6 + $0x658] sm:$0xff]
    %v301 = vld [vmem:[#allocation6 + $0x660] sm:$0xff]
    %v302 = vld [vmem:[#allocation6 + $0x668] sm:$0xff]
    %v303 = vld [vmem:[#allocation6 + $0x670] sm:$0xff]
    %v304 = vld [vmem:[#allocation6 + $0x678] sm:$0xff]
    %v305 = vld [vmem:[#allocation6 + $0x680] sm:$0xff]
    %v306 = vld [vmem:[#allocation6 + $0x688] sm:$0xff]
    %v307 = vld [vmem:[#allocation6 + $0x690] sm:$0xff]
    %v308 = vld [vmem:[#allocation6 + $0x698] sm:$0xff]
    %v309 = vld [vmem:[#allocation6 + $0x6a0] sm:$0xff]
    %v310 = vld [vmem:[#allocation6 + $0x6a8] sm:$0xff]
    %v311 = vld [vmem:[#allocation6 + $0x6b0] sm:$0xff]
    %v312 = vld [vmem:[#allocation6 + $0x6b8] sm:$0xff]
    %v313 = vld [vmem:[#allocation6 + $0x6c0] sm:$0xff]
    %v314 = vld [vmem:[#allocation6 + $0x6c8] sm:$0xff]
    %v315 = vld [vmem:[#allocation6 + $0x6d0] sm:$0xff]
    %v316 = vld [vmem:[#allocation6 + $0x6d8] sm:$0xff]
    %v317 = vld [vmem:[#allocation6 + $0x6e0] sm:$0xff]
    %v318 = vld [vmem:[#allocation6 + $0x6e8] sm:$0xff]
    %v319 = vld [vmem:[#allocation6 + $0x6f0] sm:$0xff]
    %v320 = vld [vmem:[#allocation6 + $0x6f8] sm:$0xff]
    %v321 = vld [vmem:[#allocation6 + $0x700] sm:$0xff]
    %v322 = vld [vmem:[#allocation6 + $0x708] sm:$0xff]
    %v323 = vld [vmem:[#allocation6 + $0x710] sm:$0xff]
    %v324 = vld [vmem:[#allocation6 + $0x718] sm:$0xff]
    %v325 = vld [vmem:[#allocation6 + $0x720] sm:$0xff]
    %v326 = vld [vmem:[#allocation6 + $0x728] sm:$0xff]
    %v327 = vld [vmem:[#allocation6 + $0x730] sm:$0xff]
    %v328 = vld [vmem:[#allocation6 + $0x738] sm:$0xff]
    %v329 = vld [vmem:[#allocation6 + $0x740] sm:$0xff]
    %v330 = vld [vmem:[#allocation6 + $0x748] sm:$0xff]
    %v331 = vld [vmem:[#allocation6 + $0x750] sm:$0xff]
    %v332 = vld [vmem:[#allocation6 + $0x758] sm:$0xff]
    %v333 = vld [vmem:[#allocation6 + $0x760] sm:$0xff]
    %v334 = vld [vmem:[#allocation6 + $0x768] sm:$0xff]
    %v335 = vld [vmem:[#allocation6 + $0x770] sm:$0xff]
    %v336 = vld [vmem:[#allocation6 + $0x778] sm:$0xff]
    %v337 = vld [vmem:[#allocation6 + $0x780] sm:$0xff]
    %v338 = vld [vmem:[#allocation6 + $0x788] sm:$0xff]
    %v339 = vld [vmem:[#allocation6 + $0x790] sm:$0xff]
    %v340 = vld [vmem:[#allocation6 + $0x798] sm:$0xff]
    %v341 = vld [vmem:[#allocation6 + $0x7a0] sm:$0xff]
    %v342 = vld [vmem:[#allocation6 + $0x7a8] sm:$0xff]
    %v343 = vld [vmem:[#allocation6 + $0x7b0] sm:$0xff]
    %v344 = vld [vmem:[#allocation6 + $0x7b8] sm:$0xff]
    %v345 = vld [vmem:[#allocation6 + $0x7c0] sm:$0xff]
    %v346 = vld [vmem:[#allocation6 + $0x7c8] sm:$0xff]
    %v347 = vld [vmem:[#allocation6 + $0x7d0] sm:$0xff]
    %v348 = vld [vmem:[#allocation6 + $0x7d8] sm:$0xff]
    %v349 = vld [vmem:[#allocation6 + $0x7e0] sm:$0xff]
    %v350 = vld [vmem:[#allocation6 + $0x7e8] sm:$0xff]
    %v351 = vld [vmem:[#allocation6 + $0x7f0] sm:$0xff]
    %v352 = vld [vmem:[#allocation6 + $0x7f8] sm:$0xff]
    %357 = vst [vmem:[#allocation1] ss:$2 sm:$0xff] %v93
    %s358 = scalar_lea.vmem [#allocation1], 16
    %359 = vst [vmem:[%s358] ss:$2 sm:$0xff] %v94
    %s360 = scalar_lea.vmem [#allocation1], 32
    %361 = vst [vmem:[%s360] ss:$2 sm:$0xff] %v95
    %s362 = scalar_lea.vmem [#allocation1], 48
    %363 = vst [vmem:[%s362] ss:$2 sm:$0xff] %v96
    %v364 = vld.sshfl [vmem:[#allocation1] sm:$0xff pattern:$0x75316420]
    %v365 = vld.sshfl [vmem:[#allocation1 + $0x8] sm:$0xff pattern:$0x75316420]
    %v366 = vld.sshfl [vmem:[#allocation1 + $0x10] sm:$0xff pattern:$0x75316420]
    %v367 = vld.sshfl [vmem:[#allocation1 + $0x18] sm:$0xff pattern:$0x75316420]
    %v368 = vld.sshfl [vmem:[#allocation1 + $0x20] sm:$0xff pattern:$0x75316420]
    %v369 = vld.sshfl [vmem:[#allocation1 + $0x28] sm:$0xff pattern:$0x75316420]
    %v370 = vld.sshfl [vmem:[#allocation1 + $0x30] sm:$0xff pattern:$0x75316420]
    %v371 = vld.sshfl [vmem:[#allocation1 + $0x38] sm:$0xff pattern:$0x75316420]
    %v380 = vpack.c.bf16 %v364, %v364
    %v381 = vpack.c.bf16 %v365, %v365
    %v382 = vpack.c.bf16 %v366, %v366
    %v383 = vpack.c.bf16 %v367, %v367
    %v384 = vpack.c.bf16 %v368, %v368
    %v385 = vpack.c.bf16 %v369, %v369
    %v386 = vpack.c.bf16 %v370, %v370
    %v387 = vpack.c.bf16 %v371, %v371
    %v388 = vld [vmem:[#allocation2] sm:$0xff]
    %v389 = vld [vmem:[#allocation2 + $0x8] sm:$0xff]
    %v646 = vunpack.c.l.b16 %v97
    %v647 = vunpack.c.h.b16 %v97
    %v648 = vunpack.c.l.b16 %v98
    %v649 = vunpack.c.h.b16 %v98
    %v650 = vunpack.c.l.b16 %v99
    %v651 = vunpack.c.h.b16 %v99
    %v652 = vunpack.c.l.b16 %v100
    %v653 = vunpack.c.h.b16 %v100
    %v654 = vunpack.c.l.b16 %v101
    %v655 = vunpack.c.h.b16 %v101
    %v656 = vunpack.c.l.b16 %v102
    %v657 = vunpack.c.h.b16 %v102
    %v658 = vunpack.c.l.b16 %v103
    %v659 = vunpack.c.h.b16 %v103
    %v660 = vunpack.c.l.b16 %v104
    %v661 = vunpack.c.h.b16 %v104
    %v662 = vunpack.c.l.b16 %v105
    %v663 = vunpack.c.h.b16 %v105
    %v664 = vunpack.c.l.b16 %v106
    %v665 = vunpack.c.h.b16 %v106
    %v666 = vunpack.c.l.b16 %v107
    %v667 = vunpack.c.h.b16 %v107
    %v668 = vunpack.c.l.b16 %v108
    %v669 = vunpack.c.h.b16 %v108
    %v670 = vunpack.c.l.b16 %v109
    %v671 = vunpack.c.h.b16 %v109
    %v672 = vunpack.c.l.b16 %v110
    %v673 = vunpack.c.h.b16 %v110
    %v674 = vunpack.c.l.b16 %v111
    %v675 = vunpack.c.h.b16 %v111
    %v676 = vunpack.c.l.b16 %v112
    %v677 = vunpack.c.h.b16 %v112
    %v678 = vunpack.c.l.b16 %v113
    %v679 = vunpack.c.h.b16 %v113
    %v680 = vunpack.c.l.b16 %v114
    %v681 = vunpack.c.h.b16 %v114
    %v682 = vunpack.c.l.b16 %v115
    %v683 = vunpack.c.h.b16 %v115
    %v684 = vunpack.c.l.b16 %v116
    %v685 = vunpack.c.h.b16 %v116
    %v686 = vunpack.c.l.b16 %v117
    %v687 = vunpack.c.h.b16 %v117
    %v688 = vunpack.c.l.b16 %v118
    %v689 = vunpack.c.h.b16 %v118
    %v690 = vunpack.c.l.b16 %v119
    %v691 = vunpack.c.h.b16 %v119
    %v692 = vunpack.c.l.b16 %v120
    %v693 = vunpack.c.h.b16 %v120
    %v694 = vunpack.c.l.b16 %v121
    %v695 = vunpack.c.h.b16 %v121
    %v696 = vunpack.c.l.b16 %v122
    %v697 = vunpack.c.h.b16 %v122
    %v698 = vunpack.c.l.b16 %v123
    %v699 = vunpack.c.h.b16 %v123
    %v700 = vunpack.c.l.b16 %v124
    %v701 = vunpack.c.h.b16 %v124
    %v702 = vunpack.c.l.b16 %v125
    %v703 = vunpack.c.h.b16 %v125
    %v704 = vunpack.c.l.b16 %v126
    %v705 = vunpack.c.h.b16 %v126
    %v706 = vunpack.c.l.b16 %v127
    %v707 = vunpack.c.h.b16 %v127
    %v708 = vunpack.c.l.b16 %v128
    %v709 = vunpack.c.h.b16 %v128
    %v710 = vunpack.c.l.b16 %v129
    %v711 = vunpack.c.h.b16 %v129
    %v712 = vunpack.c.l.b16 %v130
    %v713 = vunpack.c.h.b16 %v130
    %v714 = vunpack.c.l.b16 %v131
    %v715 = vunpack.c.h.b16 %v131
    %v716 = vunpack.c.l.b16 %v132
    %v717 = vunpack.c.h.b16 %v132
    %v718 = vunpack.c.l.b16 %v133
    %v719 = vunpack.c.h.b16 %v133
    %v720 = vunpack.c.l.b16 %v134
    %v721 = vunpack.c.h.b16 %v134
    %v722 = vunpack.c.l.b16 %v135
    %v723 = vunpack.c.h.b16 %v135
    %v724 = vunpack.c.l.b16 %v136
    %v725 = vunpack.c.h.b16 %v136
    %v726 = vunpack.c.l.b16 %v137
    %v727 = vunpack.c.h.b16 %v137
    %v728 = vunpack.c.l.b16 %v138
    %v729 = vunpack.c.h.b16 %v138
    %v730 = vunpack.c.l.b16 %v139
    %v731 = vunpack.c.h.b16 %v139
    %v732 = vunpack.c.l.b16 %v140
    %v733 = vunpack.c.h.b16 %v140
    %v734 = vunpack.c.l.b16 %v141
    %v735 = vunpack.c.h.b16 %v141
    %v736 = vunpack.c.l.b16 %v142
    %v737 = vunpack.c.h.b16 %v142
    %v738 = vunpack.c.l.b16 %v143
    %v739 = vunpack.c.h.b16 %v143
    %v740 = vunpack.c.l.b16 %v144
    %v741 = vunpack.c.h.b16 %v144
    %v742 = vunpack.c.l.b16 %v145
    %v743 = vunpack.c.h.b16 %v145
    %v744 = vunpack.c.l.b16 %v146
    %v745 = vunpack.c.h.b16 %v146
    %v746 = vunpack.c.l.b16 %v147
    %v747 = vunpack.c.h.b16 %v147
    %v748 = vunpack.c.l.b16 %v148
    %v749 = vunpack.c.h.b16 %v148
    %v750 = vunpack.c.l.b16 %v149
    %v751 = vunpack.c.h.b16 %v149
    %v752 = vunpack.c.l.b16 %v150
    %v753 = vunpack.c.h.b16 %v150
    %v754 = vunpack.c.l.b16 %v151
    %v755 = vunpack.c.h.b16 %v151
    %v756 = vunpack.c.l.b16 %v152
    %v757 = vunpack.c.h.b16 %v152
    %v758 = vunpack.c.l.b16 %v153
    %v759 = vunpack.c.h.b16 %v153
    %v760 = vunpack.c.l.b16 %v154
    %v761 = vunpack.c.h.b16 %v154
    %v762 = vunpack.c.l.b16 %v155
    %v763 = vunpack.c.h.b16 %v155
    %v764 = vunpack.c.l.b16 %v156
    %v765 = vunpack.c.h.b16 %v156
    %v766 = vunpack.c.l.b16 %v157
    %v767 = vunpack.c.h.b16 %v157
    %v768 = vunpack.c.l.b16 %v158
    %v769 = vunpack.c.h.b16 %v158
    %v770 = vunpack.c.l.b16 %v159
    %v771 = vunpack.c.h.b16 %v159
    %v772 = vunpack.c.l.b16 %v160
    %v773 = vunpack.c.h.b16 %v160
    %v774 = vunpack.c.l.b16 %v161
    %v775 = vunpack.c.h.b16 %v161
    %v776 = vunpack.c.l.b16 %v162
    %v777 = vunpack.c.h.b16 %v162
    %v778 = vunpack.c.l.b16 %v163
    %v779 = vunpack.c.h.b16 %v163
    %v780 = vunpack.c.l.b16 %v164
    %v781 = vunpack.c.h.b16 %v164
    %v782 = vunpack.c.l.b16 %v165
    %v783 = vunpack.c.h.b16 %v165
    %v784 = vunpack.c.l.b16 %v166
    %v785 = vunpack.c.h.b16 %v166
    %v786 = vunpack.c.l.b16 %v167
    %v787 = vunpack.c.h.b16 %v167
    %v788 = vunpack.c.l.b16 %v168
    %v789 = vunpack.c.h.b16 %v168
    %v790 = vunpack.c.l.b16 %v169
    %v791 = vunpack.c.h.b16 %v169
    %v792 = vunpack.c.l.b16 %v170
    %v793 = vunpack.c.h.b16 %v170
    %v794 = vunpack.c.l.b16 %v171
    %v795 = vunpack.c.h.b16 %v171
    %v796 = vunpack.c.l.b16 %v172
    %v797 = vunpack.c.h.b16 %v172
    %v798 = vunpack.c.l.b16 %v173
    %v799 = vunpack.c.h.b16 %v173
    %v800 = vunpack.c.l.b16 %v174
    %v801 = vunpack.c.h.b16 %v174
    %v802 = vunpack.c.l.b16 %v175
    %v803 = vunpack.c.h.b16 %v175
    %v804 = vunpack.c.l.b16 %v176
    %v805 = vunpack.c.h.b16 %v176
    %v806 = vunpack.c.l.b16 %v177
    %v807 = vunpack.c.h.b16 %v177
    %v808 = vunpack.c.l.b16 %v178
    %v809 = vunpack.c.h.b16 %v178
    %v810 = vunpack.c.l.b16 %v179
    %v811 = vunpack.c.h.b16 %v179
    %v812 = vunpack.c.l.b16 %v180
    %v813 = vunpack.c.h.b16 %v180
    %v814 = vunpack.c.l.b16 %v181
    %v815 = vunpack.c.h.b16 %v181
    %v816 = vunpack.c.l.b16 %v182
    %v817 = vunpack.c.h.b16 %v182
    %v818 = vunpack.c.l.b16 %v183
    %v819 = vunpack.c.h.b16 %v183
    %v820 = vunpack.c.l.b16 %v184
    %v821 = vunpack.c.h.b16 %v184
    %v822 = vunpack.c.l.b16 %v185
    %v823 = vunpack.c.h.b16 %v185
    %v824 = vunpack.c.l.b16 %v186
    %v825 = vunpack.c.h.b16 %v186
    %v826 = vunpack.c.l.b16 %v187
    %v827 = vunpack.c.h.b16 %v187
    %v828 = vunpack.c.l.b16 %v188
    %v829 = vunpack.c.h.b16 %v188
    %v830 = vunpack.c.l.b16 %v189
    %v831 = vunpack.c.h.b16 %v189
    %v832 = vunpack.c.l.b16 %v190
    %v833 = vunpack.c.h.b16 %v190
    %v834 = vunpack.c.l.b16 %v191
    %v835 = vunpack.c.h.b16 %v191
    %v836 = vunpack.c.l.b16 %v192
    %v837 = vunpack.c.h.b16 %v192
    %v838 = vunpack.c.l.b16 %v193
    %v839 = vunpack.c.h.b16 %v193
    %v840 = vunpack.c.l.b16 %v194
    %v841 = vunpack.c.h.b16 %v194
    %v842 = vunpack.c.l.b16 %v195
    %v843 = vunpack.c.h.b16 %v195
    %v844 = vunpack.c.l.b16 %v196
    %v845 = vunpack.c.h.b16 %v196
    %v846 = vunpack.c.l.b16 %v197
    %v847 = vunpack.c.h.b16 %v197
    %v848 = vunpack.c.l.b16 %v198
    %v849 = vunpack.c.h.b16 %v198
    %v850 = vunpack.c.l.b16 %v199
    %v851 = vunpack.c.h.b16 %v199
    %v852 = vunpack.c.l.b16 %v200
    %v853 = vunpack.c.h.b16 %v200
    %v854 = vunpack.c.l.b16 %v201
    %v855 = vunpack.c.h.b16 %v201
    %v856 = vunpack.c.l.b16 %v202
    %v857 = vunpack.c.h.b16 %v202
    %v858 = vunpack.c.l.b16 %v203
    %v859 = vunpack.c.h.b16 %v203
    %v860 = vunpack.c.l.b16 %v204
    %v861 = vunpack.c.h.b16 %v204
    %v862 = vunpack.c.l.b16 %v205
    %v863 = vunpack.c.h.b16 %v205
    %v864 = vunpack.c.l.b16 %v206
    %v865 = vunpack.c.h.b16 %v206
    %v866 = vunpack.c.l.b16 %v207
    %v867 = vunpack.c.h.b16 %v207
    %v868 = vunpack.c.l.b16 %v208
    %v869 = vunpack.c.h.b16 %v208
    %v870 = vunpack.c.l.b16 %v209
    %v871 = vunpack.c.h.b16 %v209
    %v872 = vunpack.c.l.b16 %v210
    %v873 = vunpack.c.h.b16 %v210
    %v874 = vunpack.c.l.b16 %v211
    %v875 = vunpack.c.h.b16 %v211
    %v876 = vunpack.c.l.b16 %v212
    %v877 = vunpack.c.h.b16 %v212
    %v878 = vunpack.c.l.b16 %v213
    %v879 = vunpack.c.h.b16 %v213
    %v880 = vunpack.c.l.b16 %v214
    %v881 = vunpack.c.h.b16 %v214
    %v882 = vunpack.c.l.b16 %v215
    %v883 = vunpack.c.h.b16 %v215
    %v884 = vunpack.c.l.b16 %v216
    %v885 = vunpack.c.h.b16 %v216
    %v886 = vunpack.c.l.b16 %v217
    %v887 = vunpack.c.h.b16 %v217
    %v888 = vunpack.c.l.b16 %v218
    %v889 = vunpack.c.h.b16 %v218
    %v890 = vunpack.c.l.b16 %v219
    %v891 = vunpack.c.h.b16 %v219
    %v892 = vunpack.c.l.b16 %v220
    %v893 = vunpack.c.h.b16 %v220
    %v894 = vunpack.c.l.b16 %v221
    %v895 = vunpack.c.h.b16 %v221
    %v896 = vunpack.c.l.b16 %v222
    %v897 = vunpack.c.h.b16 %v222
    %v898 = vunpack.c.l.b16 %v223
    %v899 = vunpack.c.h.b16 %v223
    %v900 = vunpack.c.l.b16 %v224
    %v901 = vunpack.c.h.b16 %v224
    %v902 = vunpack.c.l.b16 %v225
    %v903 = vunpack.c.h.b16 %v225
    %v904 = vunpack.c.l.b16 %v226
    %v905 = vunpack.c.h.b16 %v226
    %v906 = vunpack.c.l.b16 %v227
    %v907 = vunpack.c.h.b16 %v227
    %v908 = vunpack.c.l.b16 %v228
    %v909 = vunpack.c.h.b16 %v228
    %v910 = vunpack.c.l.b16 %v229
    %v911 = vunpack.c.h.b16 %v229
    %v912 = vunpack.c.l.b16 %v230
    %v913 = vunpack.c.h.b16 %v230
    %v914 = vunpack.c.l.b16 %v231
    %v915 = vunpack.c.h.b16 %v231
    %v916 = vunpack.c.l.b16 %v232
    %v917 = vunpack.c.h.b16 %v232
    %v918 = vunpack.c.l.b16 %v233
    %v919 = vunpack.c.h.b16 %v233
    %v920 = vunpack.c.l.b16 %v234
    %v921 = vunpack.c.h.b16 %v234
    %v922 = vunpack.c.l.b16 %v235
    %v923 = vunpack.c.h.b16 %v235
    %v924 = vunpack.c.l.b16 %v236
    %v925 = vunpack.c.h.b16 %v236
    %v926 = vunpack.c.l.b16 %v237
    %v927 = vunpack.c.h.b16 %v237
    %v928 = vunpack.c.l.b16 %v238
    %v929 = vunpack.c.h.b16 %v238
    %v930 = vunpack.c.l.b16 %v239
    %v931 = vunpack.c.h.b16 %v239
    %v932 = vunpack.c.l.b16 %v240
    %v933 = vunpack.c.h.b16 %v240
    %v934 = vunpack.c.l.b16 %v241
    %v935 = vunpack.c.h.b16 %v241
    %v936 = vunpack.c.l.b16 %v242
    %v937 = vunpack.c.h.b16 %v242
    %v938 = vunpack.c.l.b16 %v243
    %v939 = vunpack.c.h.b16 %v243
    %v940 = vunpack.c.l.b16 %v244
    %v941 = vunpack.c.h.b16 %v244
    %v942 = vunpack.c.l.b16 %v245
    %v943 = vunpack.c.h.b16 %v245
    %v944 = vunpack.c.l.b16 %v246
    %v945 = vunpack.c.h.b16 %v246
    %v946 = vunpack.c.l.b16 %v247
    %v947 = vunpack.c.h.b16 %v247
    %v948 = vunpack.c.l.b16 %v248
    %v949 = vunpack.c.h.b16 %v248
    %v950 = vunpack.c.l.b16 %v249
    %v951 = vunpack.c.h.b16 %v249
    %v952 = vunpack.c.l.b16 %v250
    %v953 = vunpack.c.h.b16 %v250
    %v954 = vunpack.c.l.b16 %v251
    %v955 = vunpack.c.h.b16 %v251
    %v956 = vunpack.c.l.b16 %v252
    %v957 = vunpack.c.h.b16 %v252
    %v958 = vunpack.c.l.b16 %v253
    %v959 = vunpack.c.h.b16 %v253
    %v960 = vunpack.c.l.b16 %v254
    %v961 = vunpack.c.h.b16 %v254
    %v962 = vunpack.c.l.b16 %v255
    %v963 = vunpack.c.h.b16 %v255
    %v964 = vunpack.c.l.b16 %v256
    %v965 = vunpack.c.h.b16 %v256
    %v966 = vunpack.c.l.b16 %v257
    %v967 = vunpack.c.h.b16 %v257
    %v968 = vunpack.c.l.b16 %v258
    %v969 = vunpack.c.h.b16 %v258
    %v970 = vunpack.c.l.b16 %v259
    %v971 = vunpack.c.h.b16 %v259
    %v972 = vunpack.c.l.b16 %v260
    %v973 = vunpack.c.h.b16 %v260
    %v974 = vunpack.c.l.b16 %v261
    %v975 = vunpack.c.h.b16 %v261
    %v976 = vunpack.c.l.b16 %v262
    %v977 = vunpack.c.h.b16 %v262
    %v978 = vunpack.c.l.b16 %v263
    %v979 = vunpack.c.h.b16 %v263
    %v980 = vunpack.c.l.b16 %v264
    %v981 = vunpack.c.h.b16 %v264
    %v982 = vunpack.c.l.b16 %v265
    %v983 = vunpack.c.h.b16 %v265
    %v984 = vunpack.c.l.b16 %v266
    %v985 = vunpack.c.h.b16 %v266
    %v986 = vunpack.c.l.b16 %v267
    %v987 = vunpack.c.h.b16 %v267
    %v988 = vunpack.c.l.b16 %v268
    %v989 = vunpack.c.h.b16 %v268
    %v990 = vunpack.c.l.b16 %v269
    %v991 = vunpack.c.h.b16 %v269
    %v992 = vunpack.c.l.b16 %v270
    %v993 = vunpack.c.h.b16 %v270
    %v994 = vunpack.c.l.b16 %v271
    %v995 = vunpack.c.h.b16 %v271
    %v996 = vunpack.c.l.b16 %v272
    %v997 = vunpack.c.h.b16 %v272
    %v998 = vunpack.c.l.b16 %v273
    %v999 = vunpack.c.h.b16 %v273
    %v1000 = vunpack.c.l.b16 %v274
    %v1001 = vunpack.c.h.b16 %v274
    %v1002 = vunpack.c.l.b16 %v275
    %v1003 = vunpack.c.h.b16 %v275
    %v1004 = vunpack.c.l.b16 %v276
    %v1005 = vunpack.c.h.b16 %v276
    %v1006 = vunpack.c.l.b16 %v277
    %v1007 = vunpack.c.h.b16 %v277
    %v1008 = vunpack.c.l.b16 %v278
    %v1009 = vunpack.c.h.b16 %v278
    %v1010 = vunpack.c.l.b16 %v279
    %v1011 = vunpack.c.h.b16 %v279
    %v1012 = vunpack.c.l.b16 %v280
    %v1013 = vunpack.c.h.b16 %v280
    %v1014 = vunpack.c.l.b16 %v281
    %v1015 = vunpack.c.h.b16 %v281
    %v1016 = vunpack.c.l.b16 %v282
    %v1017 = vunpack.c.h.b16 %v282
    %v1018 = vunpack.c.l.b16 %v283
    %v1019 = vunpack.c.h.b16 %v283
    %v1020 = vunpack.c.l.b16 %v284
    %v1021 = vunpack.c.h.b16 %v284
    %v1022 = vunpack.c.l.b16 %v285
    %v1023 = vunpack.c.h.b16 %v285
    %v1024 = vunpack.c.l.b16 %v286
    %v1025 = vunpack.c.h.b16 %v286
    %v1026 = vunpack.c.l.b16 %v287
    %v1027 = vunpack.c.h.b16 %v287
    %v1028 = vunpack.c.l.b16 %v288
    %v1029 = vunpack.c.h.b16 %v288
    %v1030 = vunpack.c.l.b16 %v289
    %v1031 = vunpack.c.h.b16 %v289
    %v1032 = vunpack.c.l.b16 %v290
    %v1033 = vunpack.c.h.b16 %v290
    %v1034 = vunpack.c.l.b16 %v291
    %v1035 = vunpack.c.h.b16 %v291
    %v1036 = vunpack.c.l.b16 %v292
    %v1037 = vunpack.c.h.b16 %v292
    %v1038 = vunpack.c.l.b16 %v293
    %v1039 = vunpack.c.h.b16 %v293
    %v1040 = vunpack.c.l.b16 %v294
    %v1041 = vunpack.c.h.b16 %v294
    %v1042 = vunpack.c.l.b16 %v295
    %v1043 = vunpack.c.h.b16 %v295
    %v1044 = vunpack.c.l.b16 %v296
    %v1045 = vunpack.c.h.b16 %v296
    %v1046 = vunpack.c.l.b16 %v297
    %v1047 = vunpack.c.h.b16 %v297
    %v1048 = vunpack.c.l.b16 %v298
    %v1049 = vunpack.c.h.b16 %v298
    %v1050 = vunpack.c.l.b16 %v299
    %v1051 = vunpack.c.h.b16 %v299
    %v1052 = vunpack.c.l.b16 %v300
    %v1053 = vunpack.c.h.b16 %v300
    %v1054 = vunpack.c.l.b16 %v301
    %v1055 = vunpack.c.h.b16 %v301
    %v1056 = vunpack.c.l.b16 %v302
    %v1057 = vunpack.c.h.b16 %v302
    %v1058 = vunpack.c.l.b16 %v303
    %v1059 = vunpack.c.h.b16 %v303
    %v1060 = vunpack.c.l.b16 %v304
    %v1061 = vunpack.c.h.b16 %v304
    %v1062 = vunpack.c.l.b16 %v305
    %v1063 = vunpack.c.h.b16 %v305
    %v1064 = vunpack.c.l.b16 %v306
    %v1065 = vunpack.c.h.b16 %v306
    %v1066 = vunpack.c.l.b16 %v307
    %v1067 = vunpack.c.h.b16 %v307
    %v1068 = vunpack.c.l.b16 %v308
    %v1069 = vunpack.c.h.b16 %v308
    %v1070 = vunpack.c.l.b16 %v309
    %v1071 = vunpack.c.h.b16 %v309
    %v1072 = vunpack.c.l.b16 %v310
    %v1073 = vunpack.c.h.b16 %v310
    %v1074 = vunpack.c.l.b16 %v311
    %v1075 = vunpack.c.h.b16 %v311
    %v1076 = vunpack.c.l.b16 %v312
    %v1077 = vunpack.c.h.b16 %v312
    %v1078 = vunpack.c.l.b16 %v313
    %v1079 = vunpack.c.h.b16 %v313
    %v1080 = vunpack.c.l.b16 %v314
    %v1081 = vunpack.c.h.b16 %v314
    %v1082 = vunpack.c.l.b16 %v315
    %v1083 = vunpack.c.h.b16 %v315
    %v1084 = vunpack.c.l.b16 %v316
    %v1085 = vunpack.c.h.b16 %v316
    %v1086 = vunpack.c.l.b16 %v317
    %v1087 = vunpack.c.h.b16 %v317
    %v1088 = vunpack.c.l.b16 %v318
    %v1089 = vunpack.c.h.b16 %v318
    %v1090 = vunpack.c.l.b16 %v319
    %v1091 = vunpack.c.h.b16 %v319
    %v1092 = vunpack.c.l.b16 %v320
    %v1093 = vunpack.c.h.b16 %v320
    %v1094 = vunpack.c.l.b16 %v321
    %v1095 = vunpack.c.h.b16 %v321
    %v1096 = vunpack.c.l.b16 %v322
    %v1097 = vunpack.c.h.b16 %v322
    %v1098 = vunpack.c.l.b16 %v323
    %v1099 = vunpack.c.h.b16 %v323
    %v1100 = vunpack.c.l.b16 %v324
    %v1101 = vunpack.c.h.b16 %v324
    %v1102 = vunpack.c.l.b16 %v325
    %v1103 = vunpack.c.h.b16 %v325
    %v1104 = vunpack.c.l.b16 %v326
    %v1105 = vunpack.c.h.b16 %v326
    %v1106 = vunpack.c.l.b16 %v327
    %v1107 = vunpack.c.h.b16 %v327
    %v1108 = vunpack.c.l.b16 %v328
    %v1109 = vunpack.c.h.b16 %v328
    %v1110 = vunpack.c.l.b16 %v329
    %v1111 = vunpack.c.h.b16 %v329
    %v1112 = vunpack.c.l.b16 %v330
    %v1113 = vunpack.c.h.b16 %v330
    %v1114 = vunpack.c.l.b16 %v331
    %v1115 = vunpack.c.h.b16 %v331
    %v1116 = vunpack.c.l.b16 %v332
    %v1117 = vunpack.c.h.b16 %v332
    %v1118 = vunpack.c.l.b16 %v333
    %v1119 = vunpack.c.h.b16 %v333
    %v1120 = vunpack.c.l.b16 %v334
    %v1121 = vunpack.c.h.b16 %v334
    %v1122 = vunpack.c.l.b16 %v335
    %v1123 = vunpack.c.h.b16 %v335
    %v1124 = vunpack.c.l.b16 %v336
    %v1125 = vunpack.c.h.b16 %v336
    %v1126 = vunpack.c.l.b16 %v337
    %v1127 = vunpack.c.h.b16 %v337
    %v1128 = vunpack.c.l.b16 %v338
    %v1129 = vunpack.c.h.b16 %v338
    %v1130 = vunpack.c.l.b16 %v339
    %v1131 = vunpack.c.h.b16 %v339
    %v1132 = vunpack.c.l.b16 %v340
    %v1133 = vunpack.c.h.b16 %v340
    %v1134 = vunpack.c.l.b16 %v341
    %v1135 = vunpack.c.h.b16 %v341
    %v1136 = vunpack.c.l.b16 %v342
    %v1137 = vunpack.c.h.b16 %v342
    %v1138 = vunpack.c.l.b16 %v343
    %v1139 = vunpack.c.h.b16 %v343
    %v1140 = vunpack.c.l.b16 %v344
    %v1141 = vunpack.c.h.b16 %v344
    %v1142 = vunpack.c.l.b16 %v345
    %v1143 = vunpack.c.h.b16 %v345
    %v1144 = vunpack.c.l.b16 %v346
    %v1145 = vunpack.c.h.b16 %v346
    %v1146 = vunpack.c.l.b16 %v347
    %v1147 = vunpack.c.h.b16 %v347
    %v1148 = vunpack.c.l.b16 %v348
    %v1149 = vunpack.c.h.b16 %v348
    %v1150 = vunpack.c.l.b16 %v349
    %v1151 = vunpack.c.h.b16 %v349
    %v1152 = vunpack.c.l.b16 %v350
    %v1153 = vunpack.c.h.b16 %v350
    %v1154 = vunpack.c.l.b16 %v351
    %v1155 = vunpack.c.h.b16 %v351
    %v1156 = vunpack.c.l.b16 %v352
    %v1157 = vunpack.c.h.b16 %v352
    %v1158 = vpack.c.b16 %v650, %v646
    %v1159 = vpack.c.b16 %v651, %v647
    %v1160 = vpack.c.b16 %v652, %v648
    %v1161 = vpack.c.b16 %v653, %v649
    %v1162 = vpack.c.b16 %v658, %v654
    %v1163 = vpack.c.b16 %v659, %v655
    %v1164 = vpack.c.b16 %v660, %v656
    %v1165 = vpack.c.b16 %v661, %v657
    %v1166 = vpack.c.b16 %v666, %v662
    %v1167 = vpack.c.b16 %v667, %v663
    %v1168 = vpack.c.b16 %v668, %v664
    %v1169 = vpack.c.b16 %v669, %v665
    %v1170 = vpack.c.b16 %v674, %v670
    %v1171 = vpack.c.b16 %v675, %v671
    %v1172 = vpack.c.b16 %v676, %v672
    %v1173 = vpack.c.b16 %v677, %v673
    %v1174 = vpack.c.b16 %v682, %v678
    %v1175 = vpack.c.b16 %v683, %v679
    %v1176 = vpack.c.b16 %v684, %v680
    %v1177 = vpack.c.b16 %v685, %v681
    %v1178 = vpack.c.b16 %v690, %v686
    %v1179 = vpack.c.b16 %v691, %v687
    %v1180 = vpack.c.b16 %v692, %v688
    %v1181 = vpack.c.b16 %v693, %v689
    %v1182 = vpack.c.b16 %v698, %v694
    %v1183 = vpack.c.b16 %v699, %v695
    %v1184 = vpack.c.b16 %v700, %v696
    %v1185 = vpack.c.b16 %v701, %v697
    %v1186 = vpack.c.b16 %v706, %v702
    %v1187 = vpack.c.b16 %v707, %v703
    %v1188 = vpack.c.b16 %v708, %v704
    %v1189 = vpack.c.b16 %v709, %v705
    %v1190 = vpack.c.b16 %v714, %v710
    %v1191 = vpack.c.b16 %v715, %v711
    %v1192 = vpack.c.b16 %v716, %v712
    %v1193 = vpack.c.b16 %v717, %v713
    %v1194 = vpack.c.b16 %v722, %v718
    %v1195 = vpack.c.b16 %v723, %v719
    %v1196 = vpack.c.b16 %v724, %v720
    %v1197 = vpack.c.b16 %v725, %v721
    %v1198 = vpack.c.b16 %v730, %v726
    %v1199 = vpack.c.b16 %v731, %v727
    %v1200 = vpack.c.b16 %v732, %v728
    %v1201 = vpack.c.b16 %v733, %v729
    %v1202 = vpack.c.b16 %v738, %v734
    %v1203 = vpack.c.b16 %v739, %v735
    %v1204 = vpack.c.b16 %v740, %v736
    %v1205 = vpack.c.b16 %v741, %v737
    %v1206 = vpack.c.b16 %v746, %v742
    %v1207 = vpack.c.b16 %v747, %v743
    %v1208 = vpack.c.b16 %v748, %v744
    %v1209 = vpack.c.b16 %v749, %v745
    %v1210 = vpack.c.b16 %v754, %v750
    %v1211 = vpack.c.b16 %v755, %v751
    %v1212 = vpack.c.b16 %v756, %v752
    %v1213 = vpack.c.b16 %v757, %v753
    %v1214 = vpack.c.b16 %v762, %v758
    %v1215 = vpack.c.b16 %v763, %v759
    %v1216 = vpack.c.b16 %v764, %v760
    %v1217 = vpack.c.b16 %v765, %v761
    %v1218 = vpack.c.b16 %v770, %v766
    %v1219 = vpack.c.b16 %v771, %v767
    %v1220 = vpack.c.b16 %v772, %v768
    %v1221 = vpack.c.b16 %v773, %v769
    %v1222 = vpack.c.b16 %v778, %v774
    %v1223 = vpack.c.b16 %v779, %v775
    %v1224 = vpack.c.b16 %v780, %v776
    %v1225 = vpack.c.b16 %v781, %v777
    %v1226 = vpack.c.b16 %v786, %v782
    %v1227 = vpack.c.b16 %v787, %v783
    %v1228 = vpack.c.b16 %v788, %v784
    %v1229 = vpack.c.b16 %v789, %v785
    %v1230 = vpack.c.b16 %v794, %v790
    %v1231 = vpack.c.b16 %v795, %v791
    %v1232 = vpack.c.b16 %v796, %v792
    %v1233 = vpack.c.b16 %v797, %v793
    %v1234 = vpack.c.b16 %v802, %v798
    %v1235 = vpack.c.b16 %v803, %v799
    %v1236 = vpack.c.b16 %v804, %v800
    %v1237 = vpack.c.b16 %v805, %v801
    %v1238 = vpack.c.b16 %v810, %v806
    %v1239 = vpack.c.b16 %v811, %v807
    %v1240 = vpack.c.b16 %v812, %v808
    %v1241 = vpack.c.b16 %v813, %v809
    %v1242 = vpack.c.b16 %v818, %v814
    %v1243 = vpack.c.b16 %v819, %v815
    %v1244 = vpack.c.b16 %v820, %v816
    %v1245 = vpack.c.b16 %v821, %v817
    %v1246 = vpack.c.b16 %v826, %v822
    %v1247 = vpack.c.b16 %v827, %v823
    %v1248 = vpack.c.b16 %v828, %v824
    %v1249 = vpack.c.b16 %v829, %v825
    %v1250 = vpack.c.b16 %v834, %v830
    %v1251 = vpack.c.b16 %v835, %v831
    %v1252 = vpack.c.b16 %v836, %v832
    %v1253 = vpack.c.b16 %v837, %v833
    %v1254 = vpack.c.b16 %v842, %v838
    %v1255 = vpack.c.b16 %v843, %v839
    %v1256 = vpack.c.b16 %v844, %v840
    %v1257 = vpack.c.b16 %v845, %v841
    %v1258 = vpack.c.b16 %v850, %v846
    %v1259 = vpack.c.b16 %v851, %v847
    %v1260 = vpack.c.b16 %v852, %v848
    %v1261 = vpack.c.b16 %v853, %v849
    %v1262 = vpack.c.b16 %v858, %v854
    %v1263 = vpack.c.b16 %v859, %v855
    %v1264 = vpack.c.b16 %v860, %v856
    %v1265 = vpack.c.b16 %v861, %v857
    %v1266 = vpack.c.b16 %v866, %v862
    %v1267 = vpack.c.b16 %v867, %v863
    %v1268 = vpack.c.b16 %v868, %v864
    %v1269 = vpack.c.b16 %v869, %v865
    %v1270 = vpack.c.b16 %v874, %v870
    %v1271 = vpack.c.b16 %v875, %v871
    %v1272 = vpack.c.b16 %v876, %v872
    %v1273 = vpack.c.b16 %v877, %v873
    %v1274 = vpack.c.b16 %v882, %v878
    %v1275 = vpack.c.b16 %v883, %v879
    %v1276 = vpack.c.b16 %v884, %v880
    %v1277 = vpack.c.b16 %v885, %v881
    %v1278 = vpack.c.b16 %v890, %v886
    %v1279 = vpack.c.b16 %v891, %v887
    %v1280 = vpack.c.b16 %v892, %v888
    %v1281 = vpack.c.b16 %v893, %v889
    %v1282 = vpack.c.b16 %v898, %v894
    %v1283 = vpack.c.b16 %v899, %v895
    %v1284 = vpack.c.b16 %v900, %v896
    %v1285 = vpack.c.b16 %v901, %v897
    %v1286 = vpack.c.b16 %v906, %v902
    %v1287 = vpack.c.b16 %v907, %v903
    %v1288 = vpack.c.b16 %v908, %v904
    %v1289 = vpack.c.b16 %v909, %v905
    %v1290 = vpack.c.b16 %v914, %v910
    %v1291 = vpack.c.b16 %v915, %v911
    %v1292 = vpack.c.b16 %v916, %v912
    %v1293 = vpack.c.b16 %v917, %v913
    %v1294 = vpack.c.b16 %v922, %v918
    %v1295 = vpack.c.b16 %v923, %v919
    %v1296 = vpack.c.b16 %v924, %v920
    %v1297 = vpack.c.b16 %v925, %v921
    %v1298 = vpack.c.b16 %v930, %v926
    %v1299 = vpack.c.b16 %v931, %v927
    %v1300 = vpack.c.b16 %v932, %v928
    %v1301 = vpack.c.b16 %v933, %v929
    %v1302 = vpack.c.b16 %v938, %v934
    %v1303 = vpack.c.b16 %v939, %v935
    %v1304 = vpack.c.b16 %v940, %v936
    %v1305 = vpack.c.b16 %v941, %v937
    %v1306 = vpack.c.b16 %v946, %v942
    %v1307 = vpack.c.b16 %v947, %v943
    %v1308 = vpack.c.b16 %v948, %v944
    %v1309 = vpack.c.b16 %v949, %v945
    %v1310 = vpack.c.b16 %v954, %v950
    %v1311 = vpack.c.b16 %v955, %v951
    %v1312 = vpack.c.b16 %v956, %v952
    %v1313 = vpack.c.b16 %v957, %v953
    %v1314 = vpack.c.b16 %v962, %v958
    %v1315 = vpack.c.b16 %v963, %v959
    %v1316 = vpack.c.b16 %v964, %v960
    %v1317 = vpack.c.b16 %v965, %v961
    %v1318 = vpack.c.b16 %v970, %v966
    %v1319 = vpack.c.b16 %v971, %v967
    %v1320 = vpack.c.b16 %v972, %v968
    %v1321 = vpack.c.b16 %v973, %v969
    %v1322 = vpack.c.b16 %v978, %v974
    %v1323 = vpack.c.b16 %v979, %v975
    %v1324 = vpack.c.b16 %v980, %v976
    %v1325 = vpack.c.b16 %v981, %v977
    %v1326 = vpack.c.b16 %v986, %v982
    %v1327 = vpack.c.b16 %v987, %v983
    %v1328 = vpack.c.b16 %v988, %v984
    %v1329 = vpack.c.b16 %v989, %v985
    %v1330 = vpack.c.b16 %v994, %v990
    %v1331 = vpack.c.b16 %v995, %v991
    %v1332 = vpack.c.b16 %v996, %v992
    %v1333 = vpack.c.b16 %v997, %v993
    %v1334 = vpack.c.b16 %v1002, %v998
    %v1335 = vpack.c.b16 %v1003, %v999
    %v1336 = vpack.c.b16 %v1004, %v1000
    %v1337 = vpack.c.b16 %v1005, %v1001
    %v1338 = vpack.c.b16 %v1010, %v1006
    %v1339 = vpack.c.b16 %v1011, %v1007
    %v1340 = vpack.c.b16 %v1012, %v1008
    %v1341 = vpack.c.b16 %v1013, %v1009
    %v1342 = vpack.c.b16 %v1018, %v1014
    %v1343 = vpack.c.b16 %v1019, %v1015
    %v1344 = vpack.c.b16 %v1020, %v1016
    %v1345 = vpack.c.b16 %v1021, %v1017
    %v1346 = vpack.c.b16 %v1026, %v1022
    %v1347 = vpack.c.b16 %v1027, %v1023
    %v1348 = vpack.c.b16 %v1028, %v1024
    %v1349 = vpack.c.b16 %v1029, %v1025
    %v1350 = vpack.c.b16 %v1034, %v1030
    %v1351 = vpack.c.b16 %v1035, %v1031
    %v1352 = vpack.c.b16 %v1036, %v1032
    %v1353 = vpack.c.b16 %v1037, %v1033
    %v1354 = vpack.c.b16 %v1042, %v1038
    %v1355 = vpack.c.b16 %v1043, %v1039
    %v1356 = vpack.c.b16 %v1044, %v1040
    %v1357 = vpack.c.b16 %v1045, %v1041
    %v1358 = vpack.c.b16 %v1050, %v1046
    %v1359 = vpack.c.b16 %v1051, %v1047
    %v1360 = vpack.c.b16 %v1052, %v1048
    %v1361 = vpack.c.b16 %v1053, %v1049
    %v1362 = vpack.c.b16 %v1058, %v1054
    %v1363 = vpack.c.b16 %v1059, %v1055
    %v1364 = vpack.c.b16 %v1060, %v1056
    %v1365 = vpack.c.b16 %v1061, %v1057
    %v1366 = vpack.c.b16 %v1066, %v1062
    %v1367 = vpack.c.b16 %v1067, %v1063
    %v1368 = vpack.c.b16 %v1068, %v1064
    %v1369 = vpack.c.b16 %v1069, %v1065
    %v1370 = vpack.c.b16 %v1074, %v1070
    %v1371 = vpack.c.b16 %v1075, %v1071
    %v1372 = vpack.c.b16 %v1076, %v1072
    %v1373 = vpack.c.b16 %v1077, %v1073
    %v1374 = vpack.c.b16 %v1082, %v1078
    %v1375 = vpack.c.b16 %v1083, %v1079
    %v1376 = vpack.c.b16 %v1084, %v1080
    %v1377 = vpack.c.b16 %v1085, %v1081
    %v1378 = vpack.c.b16 %v1090, %v1086
    %v1379 = vpack.c.b16 %v1091, %v1087
    %v1380 = vpack.c.b16 %v1092, %v1088
    %v1381 = vpack.c.b16 %v1093, %v1089
    %v1382 = vpack.c.b16 %v1098, %v1094
    %v1383 = vpack.c.b16 %v1099, %v1095
    %v1384 = vpack.c.b16 %v1100, %v1096
    %v1385 = vpack.c.b16 %v1101, %v1097
    %v1386 = vpack.c.b16 %v1106, %v1102
    %v1387 = vpack.c.b16 %v1107, %v1103
    %v1388 = vpack.c.b16 %v1108, %v1104
    %v1389 = vpack.c.b16 %v1109, %v1105
    %v1390 = vpack.c.b16 %v1114, %v1110
    %v1391 = vpack.c.b16 %v1115, %v1111
    %v1392 = vpack.c.b16 %v1116, %v1112
    %v1393 = vpack.c.b16 %v1117, %v1113
    %v1394 = vpack.c.b16 %v1122, %v1118
    %v1395 = vpack.c.b16 %v1123, %v1119
    %v1396 = vpack.c.b16 %v1124, %v1120
    %v1397 = vpack.c.b16 %v1125, %v1121
    %v1398 = vpack.c.b16 %v1130, %v1126
    %v1399 = vpack.c.b16 %v1131, %v1127
    %v1400 = vpack.c.b16 %v1132, %v1128
    %v1401 = vpack.c.b16 %v1133, %v1129
    %v1402 = vpack.c.b16 %v1138, %v1134
    %v1403 = vpack.c.b16 %v1139, %v1135
    %v1404 = vpack.c.b16 %v1140, %v1136
    %v1405 = vpack.c.b16 %v1141, %v1137
    %v1406 = vpack.c.b16 %v1146, %v1142
    %v1407 = vpack.c.b16 %v1147, %v1143
    %v1408 = vpack.c.b16 %v1148, %v1144
    %v1409 = vpack.c.b16 %v1149, %v1145
    %v1410 = vpack.c.b16 %v1154, %v1150
    %v1411 = vpack.c.b16 %v1155, %v1151
    %v1412 = vpack.c.b16 %v1156, %v1152
    %v1413 = vpack.c.b16 %v1157, %v1153
    %1670 = vmatpush.bf16.msra.mxu0 %v1186
    %1671 = vmatpush.bf16.msra.mxu0 %v1182
    %1672 = vmatpush.bf16.msra.mxu0 %v1178
    %1673 = vmatpush.bf16.msra.mxu0 %v1174
    %1674 = vmatpush.bf16.msra.mxu0 %v1170
    %1675 = vmatpush.bf16.msra.mxu0 %v1166
    %1676 = vmatpush.bf16.msra.mxu0 %v1162
    %1677 = vmatpush.bf16.msra.mxu0 %v1158
    %1678 = vmatmul.bf16.gmra.mxu0 %v380
    %v1679 = vpop.f32.mrf.mxu0
    %v1680 = vadd.f32 0.0, %v1679
    %v1681 = vpop.f32.mrf.mxu0
    %1682 = vdwg.mxu0
    %1683 = vmatpush.bf16.msra.mxu0 %v1218
    %1684 = vmatpush.bf16.msra.mxu0 %v1214
    %1685 = vmatpush.bf16.msra.mxu0 %v1210
    %1686 = vmatpush.bf16.msra.mxu0 %v1206
    %1687 = vmatpush.bf16.msra.mxu0 %v1202
    %1688 = vmatpush.bf16.msra.mxu0 %v1198
    %1689 = vmatpush.bf16.msra.mxu0 %v1194
    %1690 = vmatpush.bf16.msra.mxu0 %v1190
    %1691 = vmatmul.bf16.gmra.mxu0 %v381
    %v1692 = vpop.f32.mrf.mxu0
    %v1693 = vadd.f32 %v1680, %v1692
    %v1694 = vpop.f32.mrf.mxu0
    %1695 = vdwg.mxu0
    %1696 = vmatpush.bf16.msra.mxu0 %v1250
    %1697 = vmatpush.bf16.msra.mxu0 %v1246
    %1698 = vmatpush.bf16.msra.mxu0 %v1242
    %1699 = vmatpush.bf16.msra.mxu0 %v1238
    %1700 = vmatpush.bf16.msra.mxu0 %v1234
    %1701 = vmatpush.bf16.msra.mxu0 %v1230
    %1702 = vmatpush.bf16.msra.mxu0 %v1226
    %1703 = vmatpush.bf16.msra.mxu0 %v1222
    %1704 = vmatmul.bf16.gmra.mxu0 %v382
    %v1705 = vpop.f32.mrf.mxu0
    %v1706 = vadd.f32 %v1693, %v1705
    %v1707 = vpop.f32.mrf.mxu0
    %1708 = vdwg.mxu0
    %1709 = vmatpush.bf16.msra.mxu0 %v1282
    %1710 = vmatpush.bf16.msra.mxu0 %v1278
    %1711 = vmatpush.bf16.msra.mxu0 %v1274
    %1712 = vmatpush.bf16.msra.mxu0 %v1270
    %1713 = vmatpush.bf16.msra.mxu0 %v1266
    %1714 = vmatpush.bf16.msra.mxu0 %v1262
    %1715 = vmatpush.bf16.msra.mxu0 %v1258
    %1716 = vmatpush.bf16.msra.mxu0 %v1254
    %1717 = vmatmul.bf16.gmra.mxu0 %v383
    %v1718 = vpop.f32.mrf.mxu0
    %v1719 = vadd.f32 %v1706, %v1718
    %v1720 = vpop.f32.mrf.mxu0
    %1721 = vdwg.mxu0
    %1722 = vmatpush.bf16.msra.mxu0 %v1314
    %1723 = vmatpush.bf16.msra.mxu0 %v1310
    %1724 = vmatpush.bf16.msra.mxu0 %v1306
    %1725 = vmatpush.bf16.msra.mxu0 %v1302
    %1726 = vmatpush.bf16.msra.mxu0 %v1298
    %1727 = vmatpush.bf16.msra.mxu0 %v1294
    %1728 = vmatpush.bf16.msra.mxu0 %v1290
    %1729 = vmatpush.bf16.msra.mxu0 %v1286
    %1730 = vmatmul.bf16.gmra.mxu0 %v384
    %v1731 = vpop.f32.mrf.mxu0
    %v1732 = vadd.f32 %v1719, %v1731
    %v1733 = vpop.f32.mrf.mxu0
    %1734 = vdwg.mxu0
    %1735 = vmatpush.bf16.msra.mxu0 %v1346
    %1736 = vmatpush.bf16.msra.mxu0 %v1342
    %1737 = vmatpush.bf16.msra.mxu0 %v1338
    %1738 = vmatpush.bf16.msra.mxu0 %v1334
    %1739 = vmatpush.bf16.msra.mxu0 %v1330
    %1740 = vmatpush.bf16.msra.mxu0 %v1326
    %1741 = vmatpush.bf16.msra.mxu0 %v1322
    %1742 = vmatpush.bf16.msra.mxu0 %v1318
    %1743 = vmatmul.bf16.gmra.mxu0 %v385
    %v1744 = vpop.f32.mrf.mxu0
    %v1745 = vadd.f32 %v1732, %v1744
    %v1746 = vpop.f32.mrf.mxu0
    %1747 = vdwg.mxu0
    %1748 = vmatpush.bf16.msra.mxu0 %v1378
    %1749 = vmatpush.bf16.msra.mxu0 %v1374
    %1750 = vmatpush.bf16.msra.mxu0 %v1370
    %1751 = vmatpush.bf16.msra.mxu0 %v1366
    %1752 = vmatpush.bf16.msra.mxu0 %v1362
    %1753 = vmatpush.bf16.msra.mxu0 %v1358
    %1754 = vmatpush.bf16.msra.mxu0 %v1354
    %1755 = vmatpush.bf16.msra.mxu0 %v1350
    %1756 = vmatmul.bf16.gmra.mxu0 %v386
    %v1757 = vpop.f32.mrf.mxu0
    %v1758 = vadd.f32 %v1745, %v1757
    %v1759 = vpop.f32.mrf.mxu0
    %1760 = vdwg.mxu0
    %1761 = vmatpush.bf16.msra.mxu0 %v1410
    %1762 = vmatpush.bf16.msra.mxu0 %v1406
    %1763 = vmatpush.bf16.msra.mxu0 %v1402
    %1764 = vmatpush.bf16.msra.mxu0 %v1398
    %1765 = vmatpush.bf16.msra.mxu0 %v1394
    %1766 = vmatpush.bf16.msra.mxu0 %v1390
    %1767 = vmatpush.bf16.msra.mxu0 %v1386
    %1768 = vmatpush.bf16.msra.mxu0 %v1382
    %1769 = vmatmul.bf16.gmra.mxu0 %v387
    %v1770 = vpop.f32.mrf.mxu0
    %v1771 = vadd.f32 %v1758, %v1770
    %v1772 = vpop.f32.mrf.mxu0
    %1773 = vdwg.mxu0
    %1774 = vmatpush.bf16.msra.mxu0 %v1187
    %1775 = vmatpush.bf16.msra.mxu0 %v1183
    %1776 = vmatpush.bf16.msra.mxu0 %v1179
    %1777 = vmatpush.bf16.msra.mxu0 %v1175
    %1778 = vmatpush.bf16.msra.mxu0 %v1171
    %1779 = vmatpush.bf16.msra.mxu0 %v1167
    %1780 = vmatpush.bf16.msra.mxu0 %v1163
    %1781 = vmatpush.bf16.msra.mxu0 %v1159
    %1782 = vmatmul.bf16.gmra.mxu0 %v380
    %v1783 = vpop.f32.mrf.mxu0
    %v1784 = vadd.f32 0.0, %v1783
    %v1785 = vpop.f32.mrf.mxu0
    %1786 = vdwg.mxu0
    %1787 = vmatpush.bf16.msra.mxu0 %v1219
    %1788 = vmatpush.bf16.msra.mxu0 %v1215
    %1789 = vmatpush.bf16.msra.mxu0 %v1211
    %1790 = vmatpush.bf16.msra.mxu0 %v1207
    %1791 = vmatpush.bf16.msra.mxu0 %v1203
    %1792 = vmatpush.bf16.msra.mxu0 %v1199
    %1793 = vmatpush.bf16.msra.mxu0 %v1195
    %1794 = vmatpush.bf16.msra.mxu0 %v1191
    %1795 = vmatmul.bf16.gmra.mxu0 %v381
    %v1796 = vpop.f32.mrf.mxu0
    %v1797 = vadd.f32 %v1784, %v1796
    %v1798 = vpop.f32.mrf.mxu0
    %1799 = vdwg.mxu0
    %1800 = vmatpush.bf16.msra.mxu0 %v1251
    %1801 = vmatpush.bf16.msra.mxu0 %v1247
    %1802 = vmatpush.bf16.msra.mxu0 %v1243
    %1803 = vmatpush.bf16.msra.mxu0 %v1239
    %1804 = vmatpush.bf16.msra.mxu0 %v1235
    %1805 = vmatpush.bf16.msra.mxu0 %v1231
    %1806 = vmatpush.bf16.msra.mxu0 %v1227
    %1807 = vmatpush.bf16.msra.mxu0 %v1223
    %1808 = vmatmul.bf16.gmra.mxu0 %v382
    %v1809 = vpop.f32.mrf.mxu0
    %v1810 = vadd.f32 %v1797, %v1809
    %v1811 = vpop.f32.mrf.mxu0
    %1812 = vdwg.mxu0
    %1813 = vmatpush.bf16.msra.mxu0 %v1283
    %1814 = vmatpush.bf16.msra.mxu0 %v1279
    %1815 = vmatpush.bf16.msra.mxu0 %v1275
    %1816 = vmatpush.bf16.msra.mxu0 %v1271
    %1817 = vmatpush.bf16.msra.mxu0 %v1267
    %1818 = vmatpush.bf16.msra.mxu0 %v1263
    %1819 = vmatpush.bf16.msra.mxu0 %v1259
    %1820 = vmatpush.bf16.msra.mxu0 %v1255
    %1821 = vmatmul.bf16.gmra.mxu0 %v383
    %v1822 = vpop.f32.mrf.mxu0
    %v1823 = vadd.f32 %v1810, %v1822
    %v1824 = vpop.f32.mrf.mxu0
    %1825 = vdwg.mxu0
    %1826 = vmatpush.bf16.msra.mxu0 %v1315
    %1827 = vmatpush.bf16.msra.mxu0 %v1311
    %1828 = vmatpush.bf16.msra.mxu0 %v1307
    %1829 = vmatpush.bf16.msra.mxu0 %v1303
    %1830 = vmatpush.bf16.msra.mxu0 %v1299
    %1831 = vmatpush.bf16.msra.mxu0 %v1295
    %1832 = vmatpush.bf16.msra.mxu0 %v1291
    %1833 = vmatpush.bf16.msra.mxu0 %v1287
    %1834 = vmatmul.bf16.gmra.mxu0 %v384
    %v1835 = vpop.f32.mrf.mxu0
    %v1836 = vadd.f32 %v1823, %v1835
    %v1837 = vpop.f32.mrf.mxu0
    %1838 = vdwg.mxu0
    %1839 = vmatpush.bf16.msra.mxu0 %v1347
    %1840 = vmatpush.bf16.msra.mxu0 %v1343
    %1841 = vmatpush.bf16.msra.mxu0 %v1339
    %1842 = vmatpush.bf16.msra.mxu0 %v1335
    %1843 = vmatpush.bf16.msra.mxu0 %v1331
    %1844 = vmatpush.bf16.msra.mxu0 %v1327
    %1845 = vmatpush.bf16.msra.mxu0 %v1323
    %1846 = vmatpush.bf16.msra.mxu0 %v1319
    %1847 = vmatmul.bf16.gmra.mxu0 %v385
    %v1848 = vpop.f32.mrf.mxu0
    %v1849 = vadd.f32 %v1836, %v1848
    %v1850 = vpop.f32.mrf.mxu0
    %1851 = vdwg.mxu0
    %1852 = vmatpush.bf16.msra.mxu0 %v1379
    %1853 = vmatpush.bf16.msra.mxu0 %v1375
    %1854 = vmatpush.bf16.msra.mxu0 %v1371
    %1855 = vmatpush.bf16.msra.mxu0 %v1367
    %1856 = vmatpush.bf16.msra.mxu0 %v1363
    %1857 = vmatpush.bf16.msra.mxu0 %v1359
    %1858 = vmatpush.bf16.msra.mxu0 %v1355
    %1859 = vmatpush.bf16.msra.mxu0 %v1351
    %1860 = vmatmul.bf16.gmra.mxu0 %v386
    %v1861 = vpop.f32.mrf.mxu0
    %v1862 = vadd.f32 %v1849, %v1861
    %v1863 = vpop.f32.mrf.mxu0
    %1864 = vdwg.mxu0
    %1865 = vmatpush.bf16.msra.mxu0 %v1411
    %1866 = vmatpush.bf16.msra.mxu0 %v1407
    %1867 = vmatpush.bf16.msra.mxu0 %v1403
    %1868 = vmatpush.bf16.msra.mxu0 %v1399
    %1869 = vmatpush.bf16.msra.mxu0 %v1395
    %1870 = vmatpush.bf16.msra.mxu0 %v1391
    %1871 = vmatpush.bf16.msra.mxu0 %v1387
    %1872 = vmatpush.bf16.msra.mxu0 %v1383
    %1873 = vmatmul.bf16.gmra.mxu0 %v387
    %v1874 = vpop.f32.mrf.mxu0
    %v1875 = vadd.f32 %v1862, %v1874
    %v1876 = vpop.f32.mrf.mxu0
    %1877 = vdwg.mxu0
    %1878 = vmatpush.bf16.msra.mxu0 %v1188
    %1879 = vmatpush.bf16.msra.mxu0 %v1184
    %1880 = vmatpush.bf16.msra.mxu0 %v1180
    %1881 = vmatpush.bf16.msra.mxu0 %v1176
    %1882 = vmatpush.bf16.msra.mxu0 %v1172
    %1883 = vmatpush.bf16.msra.mxu0 %v1168
    %1884 = vmatpush.bf16.msra.mxu0 %v1164
    %1885 = vmatpush.bf16.msra.mxu0 %v1160
    %1886 = vmatmul.bf16.gmra.mxu0 %v380
    %v1887 = vpop.f32.mrf.mxu0
    %v1888 = vadd.f32 0.0, %v1887
    %v1889 = vpop.f32.mrf.mxu0
    %1890 = vdwg.mxu0
    %1891 = vmatpush.bf16.msra.mxu0 %v1220
    %1892 = vmatpush.bf16.msra.mxu0 %v1216
    %1893 = vmatpush.bf16.msra.mxu0 %v1212
    %1894 = vmatpush.bf16.msra.mxu0 %v1208
    %1895 = vmatpush.bf16.msra.mxu0 %v1204
    %1896 = vmatpush.bf16.msra.mxu0 %v1200
    %1897 = vmatpush.bf16.msra.mxu0 %v1196
    %1898 = vmatpush.bf16.msra.mxu0 %v1192
    %1899 = vmatmul.bf16.gmra.mxu0 %v381
    %v1900 = vpop.f32.mrf.mxu0
    %v1901 = vadd.f32 %v1888, %v1900
    %v1902 = vpop.f32.mrf.mxu0
    %1903 = vdwg.mxu0
    %1904 = vmatpush.bf16.msra.mxu0 %v1252
    %1905 = vmatpush.bf16.msra.mxu0 %v1248
    %1906 = vmatpush.bf16.msra.mxu0 %v1244
    %1907 = vmatpush.bf16.msra.mxu0 %v1240
    %1908 = vmatpush.bf16.msra.mxu0 %v1236
    %1909 = vmatpush.bf16.msra.mxu0 %v1232
    %1910 = vmatpush.bf16.msra.mxu0 %v1228
    %1911 = vmatpush.bf16.msra.mxu0 %v1224
    %1912 = vmatmul.bf16.gmra.mxu0 %v382
    %v1913 = vpop.f32.mrf.mxu0
    %v1914 = vadd.f32 %v1901, %v1913
    %v1915 = vpop.f32.mrf.mxu0
    %1916 = vdwg.mxu0
    %1917 = vmatpush.bf16.msra.mxu0 %v1284
    %1918 = vmatpush.bf16.msra.mxu0 %v1280
    %1919 = vmatpush.bf16.msra.mxu0 %v1276
    %1920 = vmatpush.bf16.msra.mxu0 %v1272
    %1921 = vmatpush.bf16.msra.mxu0 %v1268
    %1922 = vmatpush.bf16.msra.mxu0 %v1264
    %1923 = vmatpush.bf16.msra.mxu0 %v1260
    %1924 = vmatpush.bf16.msra.mxu0 %v1256
    %1925 = vmatmul.bf16.gmra.mxu0 %v383
    %v1926 = vpop.f32.mrf.mxu0
    %v1927 = vadd.f32 %v1914, %v1926
    %v1928 = vpop.f32.mrf.mxu0
    %1929 = vdwg.mxu0
    %1930 = vmatpush.bf16.msra.mxu0 %v1316
    %1931 = vmatpush.bf16.msra.mxu0 %v1312
    %1932 = vmatpush.bf16.msra.mxu0 %v1308
    %1933 = vmatpush.bf16.msra.mxu0 %v1304
    %1934 = vmatpush.bf16.msra.mxu0 %v1300
    %1935 = vmatpush.bf16.msra.mxu0 %v1296
    %1936 = vmatpush.bf16.msra.mxu0 %v1292
    %1937 = vmatpush.bf16.msra.mxu0 %v1288
    %1938 = vmatmul.bf16.gmra.mxu0 %v384
    %v1939 = vpop.f32.mrf.mxu0
    %v1940 = vadd.f32 %v1927, %v1939
    %v1941 = vpop.f32.mrf.mxu0
    %1942 = vdwg.mxu0
    %1943 = vmatpush.bf16.msra.mxu0 %v1348
    %1944 = vmatpush.bf16.msra.mxu0 %v1344
    %1945 = vmatpush.bf16.msra.mxu0 %v1340
    %1946 = vmatpush.bf16.msra.mxu0 %v1336
    %1947 = vmatpush.bf16.msra.mxu0 %v1332
    %1948 = vmatpush.bf16.msra.mxu0 %v1328
    %1949 = vmatpush.bf16.msra.mxu0 %v1324
    %1950 = vmatpush.bf16.msra.mxu0 %v1320
    %1951 = vmatmul.bf16.gmra.mxu0 %v385
    %v1952 = vpop.f32.mrf.mxu0
    %v1953 = vadd.f32 %v1940, %v1952
    %v1954 = vpop.f32.mrf.mxu0
    %1955 = vdwg.mxu0
    %1956 = vmatpush.bf16.msra.mxu0 %v1380
    %1957 = vmatpush.bf16.msra.mxu0 %v1376
    %1958 = vmatpush.bf16.msra.mxu0 %v1372
    %1959 = vmatpush.bf16.msra.mxu0 %v1368
    %1960 = vmatpush.bf16.msra.mxu0 %v1364
    %1961 = vmatpush.bf16.msra.mxu0 %v1360
    %1962 = vmatpush.bf16.msra.mxu0 %v1356
    %1963 = vmatpush.bf16.msra.mxu0 %v1352
    %1964 = vmatmul.bf16.gmra.mxu0 %v386
    %v1965 = vpop.f32.mrf.mxu0
    %v1966 = vadd.f32 %v1953, %v1965
    %v1967 = vpop.f32.mrf.mxu0
    %1968 = vdwg.mxu0
    %1969 = vmatpush.bf16.msra.mxu0 %v1412
    %1970 = vmatpush.bf16.msra.mxu0 %v1408
    %1971 = vmatpush.bf16.msra.mxu0 %v1404
    %1972 = vmatpush.bf16.msra.mxu0 %v1400
    %1973 = vmatpush.bf16.msra.mxu0 %v1396
    %1974 = vmatpush.bf16.msra.mxu0 %v1392
    %1975 = vmatpush.bf16.msra.mxu0 %v1388
    %1976 = vmatpush.bf16.msra.mxu0 %v1384
    %1977 = vmatmul.bf16.gmra.mxu0 %v387
    %v1978 = vpop.f32.mrf.mxu0
    %v1979 = vadd.f32 %v1966, %v1978
    %v1980 = vpop.f32.mrf.mxu0
    %1981 = vdwg.mxu0
    %1982 = vmatpush.bf16.msra.mxu0 %v1189
    %1983 = vmatpush.bf16.msra.mxu0 %v1185
    %1984 = vmatpush.bf16.msra.mxu0 %v1181
    %1985 = vmatpush.bf16.msra.mxu0 %v1177
    %1986 = vmatpush.bf16.msra.mxu0 %v1173
    %1987 = vmatpush.bf16.msra.mxu0 %v1169
    %1988 = vmatpush.bf16.msra.mxu0 %v1165
    %1989 = vmatpush.bf16.msra.mxu0 %v1161
    %1990 = vmatmul.bf16.gmra.mxu0 %v380
    %v1991 = vpop.f32.mrf.mxu0
    %v1992 = vadd.f32 0.0, %v1991
    %v1993 = vpop.f32.mrf.mxu0
    %1994 = vdwg.mxu0
    %1995 = vmatpush.bf16.msra.mxu0 %v1221
    %1996 = vmatpush.bf16.msra.mxu0 %v1217
    %1997 = vmatpush.bf16.msra.mxu0 %v1213
    %1998 = vmatpush.bf16.msra.mxu0 %v1209
    %1999 = vmatpush.bf16.msra.mxu0 %v1205
    %2000 = vmatpush.bf16.msra.mxu0 %v1201
    %2001 = vmatpush.bf16.msra.mxu0 %v1197
    %2002 = vmatpush.bf16.msra.mxu0 %v1193
    %2003 = vmatmul.bf16.gmra.mxu0 %v381
    %v2004 = vpop.f32.mrf.mxu0
    %v2005 = vadd.f32 %v1992, %v2004
    %v2006 = vpop.f32.mrf.mxu0
    %2007 = vdwg.mxu0
    %2008 = vmatpush.bf16.msra.mxu0 %v1253
    %2009 = vmatpush.bf16.msra.mxu0 %v1249
    %2010 = vmatpush.bf16.msra.mxu0 %v1245
    %2011 = vmatpush.bf16.msra.mxu0 %v1241
    %2012 = vmatpush.bf16.msra.mxu0 %v1237
    %2013 = vmatpush.bf16.msra.mxu0 %v1233
    %2014 = vmatpush.bf16.msra.mxu0 %v1229
    %2015 = vmatpush.bf16.msra.mxu0 %v1225
    %2016 = vmatmul.bf16.gmra.mxu0 %v382
    %v2017 = vpop.f32.mrf.mxu0
    %v2018 = vadd.f32 %v2005, %v2017
    %v2019 = vpop.f32.mrf.mxu0
    %2020 = vdwg.mxu0
    %2021 = vmatpush.bf16.msra.mxu0 %v1285
    %2022 = vmatpush.bf16.msra.mxu0 %v1281
    %2023 = vmatpush.bf16.msra.mxu0 %v1277
    %2024 = vmatpush.bf16.msra.mxu0 %v1273
    %2025 = vmatpush.bf16.msra.mxu0 %v1269
    %2026 = vmatpush.bf16.msra.mxu0 %v1265
    %2027 = vmatpush.bf16.msra.mxu0 %v1261
    %2028 = vmatpush.bf16.msra.mxu0 %v1257
    %2029 = vmatmul.bf16.gmra.mxu0 %v383
    %v2030 = vpop.f32.mrf.mxu0
    %v2031 = vadd.f32 %v2018, %v2030
    %v2032 = vpop.f32.mrf.mxu0
    %2033 = vdwg.mxu0
    %2034 = vmatpush.bf16.msra.mxu0 %v1317
    %2035 = vmatpush.bf16.msra.mxu0 %v1313
    %2036 = vmatpush.bf16.msra.mxu0 %v1309
    %2037 = vmatpush.bf16.msra.mxu0 %v1305
    %2038 = vmatpush.bf16.msra.mxu0 %v1301
    %2039 = vmatpush.bf16.msra.mxu0 %v1297
    %2040 = vmatpush.bf16.msra.mxu0 %v1293
    %2041 = vmatpush.bf16.msra.mxu0 %v1289
    %2042 = vmatmul.bf16.gmra.mxu0 %v384
    %v2043 = vpop.f32.mrf.mxu0
    %v2044 = vadd.f32 %v2031, %v2043
    %v2045 = vpop.f32.mrf.mxu0
    %2046 = vdwg.mxu0
    %2047 = vmatpush.bf16.msra.mxu0 %v1349
    %2048 = vmatpush.bf16.msra.mxu0 %v1345
    %2049 = vmatpush.bf16.msra.mxu0 %v1341
    %2050 = vmatpush.bf16.msra.mxu0 %v1337
    %2051 = vmatpush.bf16.msra.mxu0 %v1333
    %2052 = vmatpush.bf16.msra.mxu0 %v1329
    %2053 = vmatpush.bf16.msra.mxu0 %v1325
    %2054 = vmatpush.bf16.msra.mxu0 %v1321
    %2055 = vmatmul.bf16.gmra.mxu0 %v385
    %v2056 = vpop.f32.mrf.mxu0
    %v2057 = vadd.f32 %v2044, %v2056
    %v2058 = vpop.f32.mrf.mxu0
    %2059 = vdwg.mxu0
    %2060 = vmatpush.bf16.msra.mxu0 %v1381
    %2061 = vmatpush.bf16.msra.mxu0 %v1377
    %2062 = vmatpush.bf16.msra.mxu0 %v1373
    %2063 = vmatpush.bf16.msra.mxu0 %v1369
    %2064 = vmatpush.bf16.msra.mxu0 %v1365
    %2065 = vmatpush.bf16.msra.mxu0 %v1361
    %2066 = vmatpush.bf16.msra.mxu0 %v1357
    %2067 = vmatpush.bf16.msra.mxu0 %v1353
    %2068 = vmatmul.bf16.gmra.mxu0 %v386
    %v2069 = vpop.f32.mrf.mxu0
    %v2070 = vadd.f32 %v2057, %v2069
    %v2071 = vpop.f32.mrf.mxu0
    %2072 = vdwg.mxu0
    %2073 = vmatpush.bf16.msra.mxu0 %v1413
    %2074 = vmatpush.bf16.msra.mxu0 %v1409
    %2075 = vmatpush.bf16.msra.mxu0 %v1405
    %2076 = vmatpush.bf16.msra.mxu0 %v1401
    %2077 = vmatpush.bf16.msra.mxu0 %v1397
    %2078 = vmatpush.bf16.msra.mxu0 %v1393
    %2079 = vmatpush.bf16.msra.mxu0 %v1389
    %2080 = vmatpush.bf16.msra.mxu0 %v1385
    %2081 = vmatmul.bf16.gmra.mxu0 %v387
    %v2082 = vpop.f32.mrf.mxu0
    %v2083 = vadd.f32 %v2070, %v2082
    %v2084 = vpop.f32.mrf.mxu0
    %2085 = vdwg.mxu0
    %v2090 = vrot.slane %v1875, 4
    %v2091 = vrot.slane %v2083, 4
    %vm2092 = vcmask 1043456
    %v2093 = vsel %vm2092, %v1771, %v2090
    %v2094 = vsel %vm2092, %v1979, %v2091
    %v2097 = vadd.f32 %v388, %v2093
    %v2098 = vadd.f32 %v389, %v2094
    %2099 = vst [vmem:[#allocation2] sm:$0xff] %v2097
    %2100 = vst [vmem:[#allocation2 + $0x8] sm:$0xff] %v2098
    // Predicated region
    $region50: #{discriminator_forward.1} parent=1 // pred_check
      %p2101 = pneg %p87
    $region51: #{discriminator_forward.1} parent=1 // pred_check_branch
      %2103 = sbr.rel (%p2101) target = $region53
    $region52: #{discriminator_forward.1} parent=1 // pred_region
      %v2104 = vld [vmem:[#allocation2] sm:$0xff]
      %v2105 = vld [vmem:[#allocation2 + $0x8] sm:$0xff]
      %v2106 = vld [vmem:[#allocation8] sm:$0xf]
      %v2108 = vperm.slane %v2106, 0
      %v2109 = vperm.slane %v2106, 1
      %v2110 = vperm.slane %v2106, 2
      %v2111 = vperm.slane %v2106, 3
      %v2112 = vrot.slane %v2109, 4
      %v2113 = vrot.slane %v2111, 4
      %v2114 = vsel %vm2092, %v2108, %v2112
      %v2115 = vsel %vm2092, %v2110, %v2113
      %v2118 = vadd.f32 %v2104, %v2114
      %v2119 = vadd.f32 %v2105, %v2115
      %vm2120 = vcmp.gt.f32.partialorder %v2118, 0.0
      %vm2121 = vcmp.gt.f32.partialorder %v2119, 0.0
      %v2122 = vmul.f32 %v2118, 0.2
      %v2123 = vmul.f32 %v2119, 0.2
      %v2124 = vsel %vm2120, %v2118, %v2122
      %v2125 = vsel %vm2121, %v2119, %v2123
      %v2126 = vld [vmem:[#allocation9] sm:$0xff]
      %v2127 = vld [vmem:[#allocation9 + $0x8] sm:$0xff]
      %v2128 = vld [vmem:[#allocation9 + $0x10] sm:$0xff]
      %v2129 = vld [vmem:[#allocation9 + $0x18] sm:$0xff]
      %v2130 = vld [vmem:[#allocation9 + $0x20] sm:$0xff]
      %v2131 = vld [vmem:[#allocation9 + $0x28] sm:$0xff]
      %v2132 = vld [vmem:[#allocation9 + $0x30] sm:$0xff]
      %v2133 = vld [vmem:[#allocation9 + $0x38] sm:$0xff]
      %v2134 = vld [vmem:[#allocation9 + $0x40] sm:$0xff]
      %v2135 = vld [vmem:[#allocation9 + $0x48] sm:$0xff]
      %v2136 = vld [vmem:[#allocation9 + $0x50] sm:$0xff]
      %v2137 = vld [vmem:[#allocation9 + $0x58] sm:$0xff]
      %v2138 = vld [vmem:[#allocation9 + $0x60] sm:$0xff]
      %v2139 = vld [vmem:[#allocation9 + $0x68] sm:$0xff]
      %v2140 = vld [vmem:[#allocation9 + $0x70] sm:$0xff]
      %v2141 = vld [vmem:[#allocation9 + $0x78] sm:$0xff]
      %v2142 = vld [vmem:[#allocation9 + $0x80] sm:$0xff]
      %v2143 = vld [vmem:[#allocation9 + $0x88] sm:$0xff]
      %v2144 = vld [vmem:[#allocation9 + $0x90] sm:$0xff]
      %v2145 = vld [vmem:[#allocation9 + $0x98] sm:$0xff]
      %v2146 = vld [vmem:[#allocation9 + $0xa0] sm:$0xff]
      %v2147 = vld [vmem:[#allocation9 + $0xa8] sm:$0xff]
      %v2148 = vld [vmem:[#allocation9 + $0xb0] sm:$0xff]
      %v2149 = vld [vmem:[#allocation9 + $0xb8] sm:$0xff]
      %v2150 = vld [vmem:[#allocation9 + $0xc0] sm:$0xff]
      %v2151 = vld [vmem:[#allocation9 + $0xc8] sm:$0xff]
      %v2152 = vld [vmem:[#allocation9 + $0xd0] sm:$0xff]
      %v2153 = vld [vmem:[#allocation9 + $0xd8] sm:$0xff]
      %v2154 = vld [vmem:[#allocation9 + $0xe0] sm:$0xff]
      %v2155 = vld [vmem:[#allocation9 + $0xe8] sm:$0xff]
      %v2156 = vld [vmem:[#allocation9 + $0xf0] sm:$0xff]
      %v2157 = vld [vmem:[#allocation9 + $0xf8] sm:$0xff]
      %v2158 = vld [vmem:[#allocation9 + $0x100] sm:$0xff]
      %v2159 = vld [vmem:[#allocation9 + $0x108] sm:$0xff]
      %v2160 = vld [vmem:[#allocation9 + $0x110] sm:$0xff]
      %v2161 = vld [vmem:[#allocation9 + $0x118] sm:$0xff]
      %v2162 = vld [vmem:[#allocation9 + $0x120] sm:$0xff]
      %v2163 = vld [vmem:[#allocation9 + $0x128] sm:$0xff]
      %v2164 = vld [vmem:[#allocation9 + $0x130] sm:$0xff]
      %v2165 = vld [vmem:[#allocation9 + $0x138] sm:$0xff]
      %v2166 = vld [vmem:[#allocation9 + $0x140] sm:$0xff]
      %v2167 = vld [vmem:[#allocation9 + $0x148] sm:$0xff]
      %v2168 = vld [vmem:[#allocation9 + $0x150] sm:$0xff]
      %v2169 = vld [vmem:[#allocation9 + $0x158] sm:$0xff]
      %v2170 = vld [vmem:[#allocation9 + $0x160] sm:$0xff]
      %v2171 = vld [vmem:[#allocation9 + $0x168] sm:$0xff]
      %v2172 = vld [vmem:[#allocation9 + $0x170] sm:$0xff]
      %v2173 = vld [vmem:[#allocation9 + $0x178] sm:$0xff]
      %v2174 = vld [vmem:[#allocation9 + $0x180] sm:$0xff]
      %v2175 = vld [vmem:[#allocation9 + $0x188] sm:$0xff]
      %v2176 = vld [vmem:[#allocation9 + $0x190] sm:$0xff]
      %v2177 = vld [vmem:[#allocation9 + $0x198] sm:$0xff]
      %v2178 = vld [vmem:[#allocation9 + $0x1a0] sm:$0xff]
      %v2179 = vld [vmem:[#allocation9 + $0x1a8] sm:$0xff]
      %v2180 = vld [vmem:[#allocation9 + $0x1b0] sm:$0xff]
      %v2181 = vld [vmem:[#allocation9 + $0x1b8] sm:$0xff]
      %v2182 = vld [vmem:[#allocation9 + $0x1c0] sm:$0xff]
      %v2183 = vld [vmem:[#allocation9 + $0x1c8] sm:$0xff]
      %v2184 = vld [vmem:[#allocation9 + $0x1d0] sm:$0xff]
      %v2185 = vld [vmem:[#allocation9 + $0x1d8] sm:$0xff]
      %v2186 = vld [vmem:[#allocation9 + $0x1e0] sm:$0xff]
      %v2187 = vld [vmem:[#allocation9 + $0x1e8] sm:$0xff]
      %v2188 = vld [vmem:[#allocation9 + $0x1f0] sm:$0xff]
      %v2189 = vld [vmem:[#allocation9 + $0x1f8] sm:$0xff]
      %2192 = vst [vmem:[#allocation1] ss:$2 sm:$0xff] %v2124
      %s2193 = scalar_lea.vmem [#allocation1], 16
      %2194 = vst [vmem:[%s2193] ss:$2 sm:$0xff] %v2125
      %v2195 = vld.sshfl [vmem:[#allocation1] sm:$0xff pattern:$0x75316420]
      %v2196 = vld.sshfl [vmem:[#allocation1 + $0x8] sm:$0xff pattern:$0x75316420]
      %v2197 = vld.sshfl [vmem:[#allocation1 + $0x10] sm:$0xff pattern:$0x75316420]
      %v2198 = vld.sshfl [vmem:[#allocation1 + $0x18] sm:$0xff pattern:$0x75316420]
      %v2203 = vpack.c.bf16 %v2195, %v2195
      %v2204 = vpack.c.bf16 %v2196, %v2196
      %v2205 = vpack.c.bf16 %v2197, %v2197
      %v2206 = vpack.c.bf16 %v2198, %v2198
      %v2207 = vld [vmem:[%s4] sm:$0x3]
      %v2209 = vperm.slane %v2207, 0
      %v2210 = vperm.slane %v2207, 1
      %v2277 = vunpack.c.l.b16 %v2126
      %v2278 = vunpack.c.h.b16 %v2126
      %v2279 = vunpack.c.l.b16 %v2127
      %v2280 = vunpack.c.h.b16 %v2127
      %v2281 = vunpack.c.l.b16 %v2128
      %v2282 = vunpack.c.h.b16 %v2128
      %v2283 = vunpack.c.l.b16 %v2129
      %v2284 = vunpack.c.h.b16 %v2129
      %v2285 = vunpack.c.l.b16 %v2130
      %v2286 = vunpack.c.h.b16 %v2130
      %v2287 = vunpack.c.l.b16 %v2131
      %v2288 = vunpack.c.h.b16 %v2131
      %v2289 = vunpack.c.l.b16 %v2132
      %v2290 = vunpack.c.h.b16 %v2132
      %v2291 = vunpack.c.l.b16 %v2133
      %v2292 = vunpack.c.h.b16 %v2133
      %v2293 = vunpack.c.l.b16 %v2134
      %v2294 = vunpack.c.h.b16 %v2134
      %v2295 = vunpack.c.l.b16 %v2135
      %v2296 = vunpack.c.h.b16 %v2135
      %v2297 = vunpack.c.l.b16 %v2136
      %v2298 = vunpack.c.h.b16 %v2136
      %v2299 = vunpack.c.l.b16 %v2137
      %v2300 = vunpack.c.h.b16 %v2137
      %v2301 = vunpack.c.l.b16 %v2138
      %v2302 = vunpack.c.h.b16 %v2138
      %v2303 = vunpack.c.l.b16 %v2139
      %v2304 = vunpack.c.h.b16 %v2139
      %v2305 = vunpack.c.l.b16 %v2140
      %v2306 = vunpack.c.h.b16 %v2140
      %v2307 = vunpack.c.l.b16 %v2141
      %v2308 = vunpack.c.h.b16 %v2141
      %v2309 = vunpack.c.l.b16 %v2142
      %v2310 = vunpack.c.h.b16 %v2142
      %v2311 = vunpack.c.l.b16 %v2143
      %v2312 = vunpack.c.h.b16 %v2143
      %v2313 = vunpack.c.l.b16 %v2144
      %v2314 = vunpack.c.h.b16 %v2144
      %v2315 = vunpack.c.l.b16 %v2145
      %v2316 = vunpack.c.h.b16 %v2145
      %v2317 = vunpack.c.l.b16 %v2146
      %v2318 = vunpack.c.h.b16 %v2146
      %v2319 = vunpack.c.l.b16 %v2147
      %v2320 = vunpack.c.h.b16 %v2147
      %v2321 = vunpack.c.l.b16 %v2148
      %v2322 = vunpack.c.h.b16 %v2148
      %v2323 = vunpack.c.l.b16 %v2149
      %v2324 = vunpack.c.h.b16 %v2149
      %v2325 = vunpack.c.l.b16 %v2150
      %v2326 = vunpack.c.h.b16 %v2150
      %v2327 = vunpack.c.l.b16 %v2151
      %v2328 = vunpack.c.h.b16 %v2151
      %v2329 = vunpack.c.l.b16 %v2152
      %v2330 = vunpack.c.h.b16 %v2152
      %v2331 = vunpack.c.l.b16 %v2153
      %v2332 = vunpack.c.h.b16 %v2153
      %v2333 = vunpack.c.l.b16 %v2154
      %v2334 = vunpack.c.h.b16 %v2154
      %v2335 = vunpack.c.l.b16 %v2155
      %v2336 = vunpack.c.h.b16 %v2155
      %v2337 = vunpack.c.l.b16 %v2156
      %v2338 = vunpack.c.h.b16 %v2156
      %v2339 = vunpack.c.l.b16 %v2157
      %v2340 = vunpack.c.h.b16 %v2157
      %v2341 = vunpack.c.l.b16 %v2158
      %v2342 = vunpack.c.h.b16 %v2158
      %v2343 = vunpack.c.l.b16 %v2159
      %v2344 = vunpack.c.h.b16 %v2159
      %v2345 = vunpack.c.l.b16 %v2160
      %v2346 = vunpack.c.h.b16 %v2160
      %v2347 = vunpack.c.l.b16 %v2161
      %v2348 = vunpack.c.h.b16 %v2161
      %v2349 = vunpack.c.l.b16 %v2162
      %v2350 = vunpack.c.h.b16 %v2162
      %v2351 = vunpack.c.l.b16 %v2163
      %v2352 = vunpack.c.h.b16 %v2163
      %v2353 = vunpack.c.l.b16 %v2164
      %v2354 = vunpack.c.h.b16 %v2164
      %v2355 = vunpack.c.l.b16 %v2165
      %v2356 = vunpack.c.h.b16 %v2165
      %v2357 = vunpack.c.l.b16 %v2166
      %v2358 = vunpack.c.h.b16 %v2166
      %v2359 = vunpack.c.l.b16 %v2167
      %v2360 = vunpack.c.h.b16 %v2167
      %v2361 = vunpack.c.l.b16 %v2168
      %v2362 = vunpack.c.h.b16 %v2168
      %v2363 = vunpack.c.l.b16 %v2169
      %v2364 = vunpack.c.h.b16 %v2169
      %v2365 = vunpack.c.l.b16 %v2170
      %v2366 = vunpack.c.h.b16 %v2170
      %v2367 = vunpack.c.l.b16 %v2171
      %v2368 = vunpack.c.h.b16 %v2171
      %v2369 = vunpack.c.l.b16 %v2172
      %v2370 = vunpack.c.h.b16 %v2172
      %v2371 = vunpack.c.l.b16 %v2173
      %v2372 = vunpack.c.h.b16 %v2173
      %v2373 = vunpack.c.l.b16 %v2174
      %v2374 = vunpack.c.h.b16 %v2174
      %v2375 = vunpack.c.l.b16 %v2175
      %v2376 = vunpack.c.h.b16 %v2175
      %v2377 = vunpack.c.l.b16 %v2176
      %v2378 = vunpack.c.h.b16 %v2176
      %v2379 = vunpack.c.l.b16 %v2177
      %v2380 = vunpack.c.h.b16 %v2177
      %v2381 = vunpack.c.l.b16 %v2178
      %v2382 = vunpack.c.h.b16 %v2178
      %v2383 = vunpack.c.l.b16 %v2179
      %v2384 = vunpack.c.h.b16 %v2179
      %v2385 = vunpack.c.l.b16 %v2180
      %v2386 = vunpack.c.h.b16 %v2180
      %v2387 = vunpack.c.l.b16 %v2181
      %v2388 = vunpack.c.h.b16 %v2181
      %v2389 = vunpack.c.l.b16 %v2182
      %v2390 = vunpack.c.h.b16 %v2182
      %v2391 = vunpack.c.l.b16 %v2183
      %v2392 = vunpack.c.h.b16 %v2183
      %v2393 = vunpack.c.l.b16 %v2184
      %v2394 = vunpack.c.h.b16 %v2184
      %v2395 = vunpack.c.l.b16 %v2185
      %v2396 = vunpack.c.h.b16 %v2185
      %v2397 = vunpack.c.l.b16 %v2186
      %v2398 = vunpack.c.h.b16 %v2186
      %v2399 = vunpack.c.l.b16 %v2187
      %v2400 = vunpack.c.h.b16 %v2187
      %v2401 = vunpack.c.l.b16 %v2188
      %v2402 = vunpack.c.h.b16 %v2188
      %v2403 = vunpack.c.l.b16 %v2189
      %v2404 = vunpack.c.h.b16 %v2189
      %v2405 = vpack.c.b16 %v2279, %v2277
      %v2406 = vpack.c.b16 %v2280, %v2278
      %v2407 = vpack.c.b16 %v2283, %v2281
      %v2408 = vpack.c.b16 %v2284, %v2282
      %v2409 = vpack.c.b16 %v2287, %v2285
      %v2410 = vpack.c.b16 %v2288, %v2286
      %v2411 = vpack.c.b16 %v2291, %v2289
      %v2412 = vpack.c.b16 %v2292, %v2290
      %v2413 = vpack.c.b16 %v2295, %v2293
      %v2414 = vpack.c.b16 %v2296, %v2294
      %v2415 = vpack.c.b16 %v2299, %v2297
      %v2416 = vpack.c.b16 %v2300, %v2298
      %v2417 = vpack.c.b16 %v2303, %v2301
      %v2418 = vpack.c.b16 %v2304, %v2302
      %v2419 = vpack.c.b16 %v2307, %v2305
      %v2420 = vpack.c.b16 %v2308, %v2306
      %v2421 = vpack.c.b16 %v2311, %v2309
      %v2422 = vpack.c.b16 %v2312, %v2310
      %v2423 = vpack.c.b16 %v2315, %v2313
      %v2424 = vpack.c.b16 %v2316, %v2314
      %v2425 = vpack.c.b16 %v2319, %v2317
      %v2426 = vpack.c.b16 %v2320, %v2318
      %v2427 = vpack.c.b16 %v2323, %v2321
      %v2428 = vpack.c.b16 %v2324, %v2322
      %v2429 = vpack.c.b16 %v2327, %v2325
      %v2430 = vpack.c.b16 %v2328, %v2326
      %v2431 = vpack.c.b16 %v2331, %v2329
      %v2432 = vpack.c.b16 %v2332, %v2330
      %v2433 = vpack.c.b16 %v2335, %v2333
      %v2434 = vpack.c.b16 %v2336, %v2334
      %v2435 = vpack.c.b16 %v2339, %v2337
      %v2436 = vpack.c.b16 %v2340, %v2338
      %v2437 = vpack.c.b16 %v2343, %v2341
      %v2438 = vpack.c.b16 %v2344, %v2342
      %v2439 = vpack.c.b16 %v2347, %v2345
      %v2440 = vpack.c.b16 %v2348, %v2346
      %v2441 = vpack.c.b16 %v2351, %v2349
      %v2442 = vpack.c.b16 %v2352, %v2350
      %v2443 = vpack.c.b16 %v2355, %v2353
      %v2444 = vpack.c.b16 %v2356, %v2354
      %v2445 = vpack.c.b16 %v2359, %v2357
      %v2446 = vpack.c.b16 %v2360, %v2358
      %v2447 = vpack.c.b16 %v2363, %v2361
      %v2448 = vpack.c.b16 %v2364, %v2362
      %v2449 = vpack.c.b16 %v2367, %v2365
      %v2450 = vpack.c.b16 %v2368, %v2366
      %v2451 = vpack.c.b16 %v2371, %v2369
      %v2452 = vpack.c.b16 %v2372, %v2370
      %v2453 = vpack.c.b16 %v2375, %v2373
      %v2454 = vpack.c.b16 %v2376, %v2374
      %v2455 = vpack.c.b16 %v2379, %v2377
      %v2456 = vpack.c.b16 %v2380, %v2378
      %v2457 = vpack.c.b16 %v2383, %v2381
      %v2458 = vpack.c.b16 %v2384, %v2382
      %v2459 = vpack.c.b16 %v2387, %v2385
      %v2460 = vpack.c.b16 %v2388, %v2386
      %v2461 = vpack.c.b16 %v2391, %v2389
      %v2462 = vpack.c.b16 %v2392, %v2390
      %v2463 = vpack.c.b16 %v2395, %v2393
      %v2464 = vpack.c.b16 %v2396, %v2394
      %v2465 = vpack.c.b16 %v2399, %v2397
      %v2466 = vpack.c.b16 %v2400, %v2398
      %v2467 = vpack.c.b16 %v2403, %v2401
      %v2468 = vpack.c.b16 %v2404, %v2402
      %2533 = vmatpush.bf16.msra.mxu0 %v2419
      %2534 = vmatpush.bf16.msra.mxu0 %v2417
      %2535 = vmatpush.bf16.msra.mxu0 %v2415
      %2536 = vmatpush.bf16.msra.mxu0 %v2413
      %2537 = vmatpush.bf16.msra.mxu0 %v2411
      %2538 = vmatpush.bf16.msra.mxu0 %v2409
      %2539 = vmatpush.bf16.msra.mxu0 %v2407
      %2540 = vmatpush.bf16.msra.mxu0 %v2405
      %2541 = vmatmul.bf16.gmra.mxu0 %v2203
      %v2542 = vpop.f32.mrf.mxu0
      %v2543 = vadd.f32 %v2209, %v2542
      %v2544 = vpop.f32.mrf.mxu0
      %2545 = vdwg.mxu0
      %2546 = vmatpush.bf16.msra.mxu0 %v2435
      %2547 = vmatpush.bf16.msra.mxu0 %v2433
      %2548 = vmatpush.bf16.msra.mxu0 %v2431
      %2549 = vmatpush.bf16.msra.mxu0 %v2429
      %2550 = vmatpush.bf16.msra.mxu0 %v2427
      %2551 = vmatpush.bf16.msra.mxu0 %v2425
      %2552 = vmatpush.bf16.msra.mxu0 %v2423
      %2553 = vmatpush.bf16.msra.mxu0 %v2421
      %2554 = vmatmul.bf16.gmra.mxu0 %v2204
      %v2555 = vpop.f32.mrf.mxu0
      %v2556 = vadd.f32 %v2543, %v2555
      %v2557 = vpop.f32.mrf.mxu0
      %2558 = vdwg.mxu0
      %2559 = vmatpush.bf16.msra.mxu0 %v2451
      %2560 = vmatpush.bf16.msra.mxu0 %v2449
      %2561 = vmatpush.bf16.msra.mxu0 %v2447
      %2562 = vmatpush.bf16.msra.mxu0 %v2445
      %2563 = vmatpush.bf16.msra.mxu0 %v2443
      %2564 = vmatpush.bf16.msra.mxu0 %v2441
      %2565 = vmatpush.bf16.msra.mxu0 %v2439
      %2566 = vmatpush.bf16.msra.mxu0 %v2437
      %2567 = vmatmul.bf16.gmra.mxu0 %v2205
      %v2568 = vpop.f32.mrf.mxu0
      %v2569 = vadd.f32 %v2556, %v2568
      %v2570 = vpop.f32.mrf.mxu0
      %2571 = vdwg.mxu0
      %2572 = vmatpush.bf16.msra.mxu0 %v2467
      %2573 = vmatpush.bf16.msra.mxu0 %v2465
      %2574 = vmatpush.bf16.msra.mxu0 %v2463
      %2575 = vmatpush.bf16.msra.mxu0 %v2461
      %2576 = vmatpush.bf16.msra.mxu0 %v2459
      %2577 = vmatpush.bf16.msra.mxu0 %v2457
      %2578 = vmatpush.bf16.msra.mxu0 %v2455
      %2579 = vmatpush.bf16.msra.mxu0 %v2453
      %2580 = vmatmul.bf16.gmra.mxu0 %v2206
      %v2581 = vpop.f32.mrf.mxu0
      %v2582 = vadd.f32 %v2569, %v2581
      %v2583 = vpop.f32.mrf.mxu0
      %2584 = vdwg.mxu0
      %2585 = vmatpush.bf16.msra.mxu0 %v2420
      %2586 = vmatpush.bf16.msra.mxu0 %v2418
      %2587 = vmatpush.bf16.msra.mxu0 %v2416
      %2588 = vmatpush.bf16.msra.mxu0 %v2414
      %2589 = vmatpush.bf16.msra.mxu0 %v2412
      %2590 = vmatpush.bf16.msra.mxu0 %v2410
      %2591 = vmatpush.bf16.msra.mxu0 %v2408
      %2592 = vmatpush.bf16.msra.mxu0 %v2406
      %2593 = vmatmul.bf16.gmra.mxu0 %v2203
      %v2594 = vpop.f32.mrf.mxu0
      %v2595 = vadd.f32 %v2210, %v2594
      %v2596 = vpop.f32.mrf.mxu0
      %2597 = vdwg.mxu0
      %2598 = vmatpush.bf16.msra.mxu0 %v2436
      %2599 = vmatpush.bf16.msra.mxu0 %v2434
      %2600 = vmatpush.bf16.msra.mxu0 %v2432
      %2601 = vmatpush.bf16.msra.mxu0 %v2430
      %2602 = vmatpush.bf16.msra.mxu0 %v2428
      %2603 = vmatpush.bf16.msra.mxu0 %v2426
      %2604 = vmatpush.bf16.msra.mxu0 %v2424
      %2605 = vmatpush.bf16.msra.mxu0 %v2422
      %2606 = vmatmul.bf16.gmra.mxu0 %v2204
      %v2607 = vpop.f32.mrf.mxu0
      %v2608 = vadd.f32 %v2595, %v2607
      %v2609 = vpop.f32.mrf.mxu0
      %2610 = vdwg.mxu0
      %2611 = vmatpush.bf16.msra.mxu0 %v2452
      %2612 = vmatpush.bf16.msra.mxu0 %v2450
      %2613 = vmatpush.bf16.msra.mxu0 %v2448
      %2614 = vmatpush.bf16.msra.mxu0 %v2446
      %2615 = vmatpush.bf16.msra.mxu0 %v2444
      %2616 = vmatpush.bf16.msra.mxu0 %v2442
      %2617 = vmatpush.bf16.msra.mxu0 %v2440
      %2618 = vmatpush.bf16.msra.mxu0 %v2438
      %2619 = vmatmul.bf16.gmra.mxu0 %v2205
      %v2620 = vpop.f32.mrf.mxu0
      %v2621 = vadd.f32 %v2608, %v2620
      %v2622 = vpop.f32.mrf.mxu0
      %2623 = vdwg.mxu0
      %2624 = vmatpush.bf16.msra.mxu0 %v2468
      %2625 = vmatpush.bf16.msra.mxu0 %v2466
      %2626 = vmatpush.bf16.msra.mxu0 %v2464
      %2627 = vmatpush.bf16.msra.mxu0 %v2462
      %2628 = vmatpush.bf16.msra.mxu0 %v2460
      %2629 = vmatpush.bf16.msra.mxu0 %v2458
      %2630 = vmatpush.bf16.msra.mxu0 %v2456
      %2631 = vmatpush.bf16.msra.mxu0 %v2454
      %2632 = vmatmul.bf16.gmra.mxu0 %v2206
      %v2633 = vpop.f32.mrf.mxu0
      %v2634 = vadd.f32 %v2621, %v2633
      %v2635 = vpop.f32.mrf.mxu0
      %2636 = vdwg.mxu0
      %vm2637 = vcmp.gt.f32.partialorder %v2582, 0.0
      %vm2638 = vcmp.gt.f32.partialorder %v2634, 0.0
      %v2639 = vmul.f32 %v2582, 0.2
      %v2640 = vmul.f32 %v2634, 0.2
      %v2641 = vsel %vm2637, %v2582, %v2639
      %v2642 = vsel %vm2638, %v2634, %v2640
      %v2643 = vld [vmem:[%s5] sm:$0x3]
      %v2644 = vunpack.c.l.bf16 %v2643
      %v2646 = vperm.slane %v2644, 0
      %v2647 = vperm.slane %v2644, 2
      %v2650 = vperm.slane %v2646, 0
      %v2651 = vperm.slane %v2647, 0
      %v2652 = vmul.f32 %v2641, %v2650
      %v2653 = vmul.f32 %v2642, %v2651
      %v2654 = vsel %vm2092, %v2652, 0.0
      %v2655 = vsel %vm2092, %v2653, 0.0
      %v2656 = vadd.f32 %v2654, %v2655
      %2657 = vadd.xlane.f32.xlu0 %v2656
      %v2658 = vpop.xlane.xlu0 %2657
      %v2659 = vld [vmem:[#allocation3] sm:$0x1]
      %v2661 = vperm.slane %v2659, 0
      %v2663 = vadd.f32 %v2658, %v2661
      %vm2664 = vcmask 3072
      %2665 = vst.msk [vmem:[%s7] sm:$0xf] %vm2664, %v2663
    $region53: #{discriminator_forward.1} parent=1 // pred_fallthru
      _
    // Predicated region
    $region54: #{discriminator_forward.1} parent=1 // pred_check
      _
    $region55: #{discriminator_forward.1} parent=1 // pred_check_branch
      %2667 = sbr.rel (0) target = $region57
    $region56: #{discriminator_forward.1} parent=1 // pred_region
      _
    $region57: #{discriminator_forward.1} parent=1 // pred_fallthru
      _
    // Predicated region
    $region58: #{discriminator_forward.1} parent=1 // pred_check
      _
    $region59: #{discriminator_forward.1} parent=1 // pred_check_branch
      %2669 = sbr.rel (0) target = $region61
    $region60: #{discriminator_forward.1} parent=1 // pred_region
      _
    $region61: #{discriminator_forward.1} parent=1 // pred_fallthru
      _
    %2670 = vsyncpa [#allocation5], 1
    %2671 = vsyncpa [#allocation7], 1
    %2672 = vsyncpa [#allocation10], 1

</llo_original>
